<compile_context>
chip_gen: v7x
topology: tpu7x:2x2x1
jax: 0.10.0
libtpu: 0.0.40
codegen_flags: <defaults>
</compile_context>

<pallas_src>
import functools
import math

import jax
import jax.numpy as jnp
from jax.experimental import pallas as pl
from jax.experimental.pallas import tpu as pltpu


# ----------------------------------------------------------------------------
# Pallas kernels
# ----------------------------------------------------------------------------
def _qkv_proj_kernel(xq_ref, xk_ref, xv_ref, wq_ref, wk_ref, wv_ref, b_ref,
                     q_ref, k_ref, v_ref, cache_ref, *, n_head, d_k):
    """Fused q/k/v projections + head-major cache writeback for one batch."""
    b = b_ref[...]                                   # (3, F) f32: [bq*s, bk, bv]
    xq = xq_ref[...].astype(jnp.bfloat16)            # cast in-kernel (VPU, free)
    xk = xk_ref[...].astype(jnp.bfloat16)
    xv = xv_ref[...].astype(jnp.bfloat16)

    q = jnp.dot(xq, wq_ref[...], preferred_element_type=jnp.float32) + b[0:1, :]
    k = jnp.dot(xk, wk_ref[...], preferred_element_type=jnp.float32) + b[1:2, :]
    v = jnp.dot(xv, wv_ref[...], preferred_element_type=jnp.float32) + b[2:3, :]

    q_ref[...] = q.astype(q_ref.dtype)               # bf16 intermediates
    k_ref[...] = k.astype(k_ref.dtype)
    v_ref[...] = v.astype(v_ref.dtype)

    # new_cache = concat(k, v, -1) in (H, T2, 2*d_k) head-major layout, written
    # while k/v are still in VMEM (avoids a separate XLA relayout HBM pass).
    for h in range(n_head):                          # static unroll over heads
        sl = slice(h * d_k, (h + 1) * d_k)
        cache_ref[h, :, 0:d_k] = k[:, sl].astype(cache_ref.dtype)
        cache_ref[h, :, d_k:2 * d_k] = v[:, sl].astype(cache_ref.dtype)


def _attn_kernel(q_ref, k_ref, v_ref, p_ref, bu_ref, rbc_ref, keep_ref,
                 wo_ref, bo_ref, o_ref, ctx_ref, *, n_head, d_k):
    """Rel-pos attention for one (batch, q-tile) + fused output projection."""
    q = q_ref[...]                                   # (tq, F) bf16, *1/sqrt(dk)
    keep = keep_ref[...]                             # (Tm, T2) f32 in {0, 1}
    neg_bias = (keep - 1.0) * 1e30                   # 0 valid / -1e30 masked

    # ac + bd folded into one matmul: q @ (k+p)^T.  Transpose (k+p) once per
    # grid step (one XLU transpose), slice sublane rows per head afterwards.
    kp = k_ref[...].astype(jnp.float32) + p_ref[...].astype(jnp.float32)
    kp_t = kp.T.astype(jnp.bfloat16)                 # (F, T2) bf16

    # Consolidated per-head row biases:
    #   bu_h@k_h^T + bv_h@p_h^T == row_h[ bu_bd@(k+p)^T + (bv_bd - bu_bd)@p^T ]
    # second term is batch-independent and precomputed (rbc_ref, f32 (H, T2)).
    rb = (jnp.dot(bu_ref[...], kp_t, preferred_element_type=jnp.float32)
          + rbc_ref[...])                            # (H, T2) f32

    for h in range(n_head):                          # static unroll over heads
        sl = slice(h * d_k, (h + 1) * d_k)
        scores = (jnp.dot(q[:, sl], kp_t[sl, :],
                          preferred_element_type=jnp.float32)
                  + rb[h:h + 1, :] + neg_bias)       # (tq, T2) f32

        s_max = jnp.max(scores, axis=-1, keepdims=True)
        e = jnp.exp(scores - s_max)                  # masked cols -> exactly 0
        denom = jnp.sum(e, axis=-1, keepdims=True)
        attn = (e * pl.reciprocal(denom, approx=True)) * keep   # masked_fill(0)
        ctx_ref[:, sl] = jnp.dot(attn.astype(jnp.bfloat16), v_ref[:, sl],
                                 preferred_element_type=jnp.float32)

    o_ref[...] = (jnp.dot(ctx_ref[...].astype(jnp.bfloat16), wo_ref[...],
                          preferred_element_type=jnp.float32)
                  + bo_ref[...]).astype(o_ref.dtype)


# ----------------------------------------------------------------------------
# Wrapper
# ----------------------------------------------------------------------------
def rel_pos_mha_forward(params, n_head, query, key, value, mask, pos_emb):
    """Pallas implementation of RelPositionMultiHeadedAttention.forward.

    query: (B, T1, F), key/value: (B, T2, F), pos_emb: (1, T2, F),
    mask:  (B, 1, T2) or (B, T1, T2), int (1 = valid, 0 = padded),
           or a fake mask with mask.shape[-1] == 0.
    Returns (output (B, T1, F) f32, new_cache (B, H, T2, 2*d_k) f32).
    """
    B, T1, F = query.shape
    T2 = key.shape[1]
    H = n_head
    Dk = F // H
    s = 1.0 / math.sqrt(Dk)
    bf16 = jnp.bfloat16

    assert pos_emb.shape[0] == 1 and pos_emb.shape[1] == T2
    # TODO(synk): pos_emb with batch > 1 (not used in wenet) is unsupported.

    # ---- weight prep (once under jit): (in, out) layout, bf16 MXU operands,
    # 1/sqrt(d_k) folded into the q path ----
    wq_t = (params["wq"].T * s).astype(bf16)
    wk_t = params["wk"].T.astype(bf16)
    wv_t = params["wv"].T.astype(bf16)
    wo_t = params["wo"].T.astype(bf16)
    b_qkv = jnp.stack([params["bq"] * s, params["bk"], params["bv"]], axis=0)
    bo = params["bo"].reshape(1, F)

    # ---- shared (batch-independent) positional path, once, in plain XLA ----
    pos2d = pos_emb.reshape(T2, F)
    p_bf = jnp.dot(pos2d, params["wp"].T).astype(bf16)           # (T2, F)

    # block-"diagonal" bias matrices: row h holds pos_bias_*[h] in head-h lanes
    eye = jnp.eye(H, dtype=jnp.float32)
    bu_bd = (eye[:, :, None] * (params["pos_bias_u"] * s)[None]).reshape(H, F)
    bv_bd = (eye[:, :, None] * (params["pos_bias_v"] * s)[None]).reshape(H, F)
    # batch-independent part of the row bias: (bv_bd - bu_bd) @ p^T -> (H, T2)
    rb_const = jnp.dot(bv_bd - bu_bd, p_bf.astype(jnp.float32).T)
    bu_bd_bf = bu_bd.astype(bf16)

    # mask -> f32 keep matrix (1 = valid), sliced to the score width
    if mask.shape[-1] > 0:
        keep = mask[..., :T2].astype(jnp.float32)                # (B, Tm, T2)
    else:
        keep = jnp.ones((B, 1, T2), jnp.float32)                 # fake mask
    Tm = keep.shape[1]

    # ---- kernel 1: fused q/k/v projections + head-major cache ----
    ce_proj = pl.CostEstimate(
        flops=2 * B * (T1 + 2 * T2) * F * F,
        transcendentals=0,
        bytes_accessed=(4 * B * (T1 + 2 * T2) * F      # f32 activations in
                        + 2 * 3 * F * F + 4 * 3 * F    # weights / biases
                        + 2 * B * (T1 + 2 * T2) * F    # bf16 q/k/v out
                        + 4 * 2 * B * T2 * F))         # f32 cache out
    q, k, v, new_cache = pl.pallas_call(
        functools.partial(_qkv_proj_kernel, n_head=H, d_k=Dk),
        out_shape=(
            jax.ShapeDtypeStruct((B, T1, F), bf16),
            jax.ShapeDtypeStruct((B, T2, F), bf16),
            jax.ShapeDtypeStruct((B, T2, F), bf16),
            jax.ShapeDtypeStruct((B, H, T2, 2 * Dk), jnp.float32),
        ),
        grid=(B,),
        in_specs=[
            pl.BlockSpec((None, T1, F), lambda b: (b, 0, 0)),    # query
            pl.BlockSpec((None, T2, F), lambda b: (b, 0, 0)),    # key
            pl.BlockSpec((None, T2, F), lambda b: (b, 0, 0)),    # value
            pl.BlockSpec((F, F), lambda b: (0, 0)),              # wq^T * s (bf16)
            pl.BlockSpec((F, F), lambda b: (0, 0)),              # wk^T (bf16)
            pl.BlockSpec((F, F), lambda b: (0, 0)),              # wv^T (bf16)
            pl.BlockSpec((3, F), lambda b: (0, 0)),              # stacked biases
        ],
        out_specs=(
            pl.BlockSpec((None, T1, F), lambda b: (b, 0, 0)),    # q (pre-scaled)
            pl.BlockSpec((None, T2, F), lambda b: (b, 0, 0)),    # k
            pl.BlockSpec((None, T2, F), lambda b: (b, 0, 0)),    # v
            pl.BlockSpec((None, H, T2, 2 * Dk), lambda b: (b, 0, 0, 0)),  # cache
        ),
        compiler_params=pltpu.CompilerParams(
            dimension_semantics=("parallel",),
            vmem_limit_bytes=32 * 1024 * 1024),
        cost_estimate=ce_proj,
    )(query, key, value, wq_t, wk_t, wv_t, b_qkv)

    # ---- kernel 2: rel-pos attention + fused output projection ----
    tq = T1
    for cand in (512, 256, 128, 64, 32, 16, 8):                  # q-tile size
        if T1 % cand == 0:
            tq = cand
            break
    n_q = T1 // tq

    if Tm == 1:   # key-padding mask: same row for every q tile
        mask_spec = pl.BlockSpec((None, 1, T2), lambda b, i: (b, 0, 0))
    else:         # full (T1, T2) mask: tile along T1 with the queries
        mask_spec = pl.BlockSpec((None, tq, T2), lambda b, i: (b, i, 0))

    ce_attn = pl.CostEstimate(
        flops=(4 * B * T1 * T2 * F            # q@(k+p)^T and attn@v
               + 2 * B * T1 * F * F           # output projection
               + 2 * B * n_q * H * F * T2),   # consolidated row-bias matmul
        transcendentals=B * T1 * T2 + B * T1 * H,
        bytes_accessed=(2 * B * T1 * F + 2 * 2 * B * n_q * T2 * F + 2 * T2 * F
                        + 4 * B * Tm * T2 + 2 * F * F + 4 * B * T1 * F))
    out = pl.pallas_call(
        functools.partial(_attn_kernel, n_head=H, d_k=Dk),
        out_shape=jax.ShapeDtypeStruct((B, T1, F), jnp.float32),
        grid=(B, n_q),
        in_specs=[
            pl.BlockSpec((None, tq, F), lambda b, i: (b, i, 0)),  # q (bf16)
            pl.BlockSpec((None, T2, F), lambda b, i: (b, 0, 0)),  # k (bf16)
            pl.BlockSpec((None, T2, F), lambda b, i: (b, 0, 0)),  # v (bf16)
            pl.BlockSpec((T2, F), lambda b, i: (0, 0)),           # p (bf16)
            pl.BlockSpec((H, F), lambda b, i: (0, 0)),            # bu_bd (bf16)
            pl.BlockSpec((H, T2), lambda b, i: (0, 0)),           # rb_const (f32)
            mask_spec,                                            # keep (f32)
            pl.BlockSpec((F, F), lambda b, i: (0, 0)),            # wo^T (bf16)
            pl.BlockSpec((1, F), lambda b, i: (0, 0)),            # bo (f32)
        ],
        out_specs=pl.BlockSpec((None, tq, F), lambda b, i: (b, i, 0)),
        scratch_shapes=[pltpu.VMEM((tq, F), jnp.float32)],        # ctx buffer
        compiler_params=pltpu.CompilerParams(
            dimension_semantics=("parallel", "parallel"),
            vmem_limit_bytes=32 * 1024 * 1024),
        cost_estimate=ce_attn,
    )(q, k, v, p_bf, bu_bd_bf, rb_const, keep, wo_t, bo)

    # TODO(synk): non-empty `cache` input (streaming decode) would be
    # concatenated onto k/v here before the attention kernel; not exercised.
    return out, new_cache


# ----------------------------------------------------------------------------
# Pure-JAX reference (PyTorch-faithful) for a sanity check of the Pallas path
# ----------------------------------------------------------------------------
def ref_forward(params, n_head, query, key, value, mask, pos_emb):
    B, T1, F = query.shape
    T2 = key.shape[1]
    H = n_head
    Dk = F // H
    hp = jax.lax.Precision.HIGHEST

    def lin(x, w, b):
        return jnp.dot(x, w.T, precision=hp) + b

    q = lin(query, params["wq"], params["bq"]).reshape(B, T1, H, Dk).transpose(0, 2, 1, 3)
    k = lin(key, params["wk"], params["bk"]).reshape(B, T2, H, Dk).transpose(0, 2, 1, 3)
    v = lin(value, params["wv"], params["bv"]).reshape(B, T2, H, Dk).transpose(0, 2, 1, 3)
    p = jnp.dot(pos_emb, params["wp"].T, precision=hp).reshape(1, T2, H, Dk).transpose(0, 2, 1, 3)

    q_u = q + params["pos_bias_u"][None, :, None, :]
    q_v = q + params["pos_bias_v"][None, :, None, :]
    ac = jnp.einsum("bhqd,bhkd->bhqk", q_u, k, precision=hp)
    bd = jnp.einsum("bhqd,xhkd->bhqk", q_v, p, precision=hp)
    scores = (ac + bd) / math.sqrt(Dk)

    m = (mask[:, None, :, :] == 0)                       # (B,1,Tm,T2)
    scores = jnp.where(m, -jnp.inf, scores)
    attn = jax.nn.softmax(scores, axis=-1)
    attn = jnp.where(m, 0.0, attn)
    x = jnp.einsum("bhqk,bhkd->bhqd", attn, v, precision=hp)
    x = x.transpose(0, 2, 1, 3).reshape(B, T1, F)
    out = lin(x, params["wo"], params["bo"])
    new_cache = jnp.concatenate([k, v], axis=-1)
    return out, new_cache


# ----------------------------------------------------------------------------
# Main
# ----------------------------------------------------------------------------
if __name__ == "__main__":
    B, T1, T2 = 2, 8, 8
    n_head, n_feat = 4, 32
    d_k = n_feat // n_head

    key0 = jax.random.PRNGKey(0)
    keys = jax.random.split(key0, 16)

    def init_w(k, shape, fan_in):
        return jax.random.normal(k, shape, jnp.float32) / math.sqrt(fan_in)

    params = {
        "wq": init_w(keys[0], (n_feat, n_feat), n_feat),
        "bq": init_w(keys[1], (n_feat,), n_feat),
        "wk": init_w(keys[2], (n_feat, n_feat), n_feat),
        "bk": init_w(keys[3], (n_feat,), n_feat),          # key_bias=True
        "wv": init_w(keys[4], (n_feat, n_feat), n_feat),
        "bv": init_w(keys[5], (n_feat,), n_feat),
        "wo": init_w(keys[6], (n_feat, n_feat), n_feat),
        "bo": init_w(keys[7], (n_feat,), n_feat),
        "wp": init_w(keys[8], (n_feat, n_feat), n_feat),   # linear_pos, bias=False
        "pos_bias_u": init_w(keys[9], (n_head, d_k), d_k),
        "pos_bias_v": init_w(keys[10], (n_head, d_k), d_k),
    }

    query = jax.random.normal(keys[11], (B, T1, n_feat), jnp.float32)
    key_t = jax.random.normal(keys[12], (B, T2, n_feat), jnp.float32)
    value = jax.random.normal(keys[13], (B, T2, n_feat), jnp.float32)
    pos_emb = jax.random.normal(keys[14], (1, T2, n_feat), jnp.float32)

    # key-padding mask (B, 1, T2): batch 0 sees all 8 keys, batch 1 only 6
    lengths = jnp.array([8, 6], jnp.int32)
    mask = (jnp.arange(T2)[None, None, :] < lengths[:, None, None]).astype(jnp.int32)

    fwd = jax.jit(functools.partial(rel_pos_mha_forward, params, n_head))
    out, new_cache = fwd(query, key_t, value, mask, pos_emb)
    out = jax.block_until_ready(out)
    new_cache = jax.block_until_ready(new_cache)

    # sanity check against a pure-JAX reference (loose tol: bf16 MXU operands
    # with f32 accumulation + approx reciprocal vs HIGHEST-precision f32)
    ref_out, ref_cache = ref_forward(
        params, n_head, query, key_t, value, mask, pos_emb)
    assert out.shape == (B, T1, n_feat)
    assert new_cache.shape == (B, n_head, T2, 2 * d_k)
    assert jnp.allclose(out, ref_out, rtol=5e-2, atol=5e-2)
    assert jnp.allclose(new_cache, ref_cache, rtol=5e-2, atol=5e-2)

    # TODO(synk): dropout on attention weights is identity here (eval mode).
    print("KERNEL_OK")
</pallas_src>

<mosaic_0001>
module attributes {stable_mosaic.version = 11 : i64} {
  func.func @_qkv_proj_kernel(%arg0: i32, %arg1: memref<1x8x32xf32, #tpu.memory_space<vmem>>, %arg2: memref<1x8x32xf32, #tpu.memory_space<vmem>>, %arg3: memref<1x8x32xf32, #tpu.memory_space<vmem>>, %arg4: memref<32x32xbf16, #tpu.memory_space<vmem>>, %arg5: memref<32x32xbf16, #tpu.memory_space<vmem>>, %arg6: memref<32x32xbf16, #tpu.memory_space<vmem>>, %arg7: memref<3x32xf32, #tpu.memory_space<vmem>>, %arg8: memref<1x8x32xbf16, #tpu.memory_space<vmem>>, %arg9: memref<1x8x32xbf16, #tpu.memory_space<vmem>>, %arg10: memref<1x8x32xbf16, #tpu.memory_space<vmem>>, %arg11: memref<1x4x8x16xf32, #tpu.memory_space<vmem>>) attributes {dimension_semantics = [#tpu.dimension_semantics<parallel>], iteration_bounds = array<i64: 2>, scalar_prefetch = 0 : i64, scratch_operands = 0 : i64, tpu.core_type = #tpu.core_type<tc>, window_params = [{transform_indices = @transform_0, window_bounds = array<i64: 1, 8, 32>}, {transform_indices = @transform_1, window_bounds = array<i64: 1, 8, 32>}, {transform_indices = @transform_2, window_bounds = array<i64: 1, 8, 32>}, {pipeline_mode = #tpu.pipeline_mode<synchronous>, transform_indices = @transform_3, window_bounds = array<i64: 32, 32>}, {pipeline_mode = #tpu.pipeline_mode<synchronous>, transform_indices = @transform_4, window_bounds = array<i64: 32, 32>}, {pipeline_mode = #tpu.pipeline_mode<synchronous>, transform_indices = @transform_5, window_bounds = array<i64: 32, 32>}, {pipeline_mode = #tpu.pipeline_mode<synchronous>, transform_indices = @transform_6, window_bounds = array<i64: 3, 32>}, {transform_indices = @transform_7, window_bounds = array<i64: 1, 8, 32>}, {transform_indices = @transform_8, window_bounds = array<i64: 1, 8, 32>}, {transform_indices = @transform_9, window_bounds = array<i64: 1, 8, 32>}, {transform_indices = @transform_10, window_bounds = array<i64: 1, 4, 8, 16>}]} {
    %c0 = arith.constant 0 : index
    %c0_0 = arith.constant 0 : index
    %0 = vector.load %arg7[%c0, %c0_0] : memref<3x32xf32, #tpu.memory_space<vmem>>, vector<3x32xf32>
    %c0_1 = arith.constant 0 : index
    %c0_2 = arith.constant 0 : index
    %c0_3 = arith.constant 0 : index
    %1 = vector.load %arg1[%c0_1, %c0_2, %c0_3] : memref<1x8x32xf32, #tpu.memory_space<vmem>>, vector<1x8x32xf32>
    %2 = vector.shape_cast %1 : vector<1x8x32xf32> to vector<8x32xf32>
    %3 = arith.truncf %2 : vector<8x32xf32> to vector<8x32xbf16>
    %c0_4 = arith.constant 0 : index
    %c0_5 = arith.constant 0 : index
    %c0_6 = arith.constant 0 : index
    %4 = vector.load %arg2[%c0_4, %c0_5, %c0_6] : memref<1x8x32xf32, #tpu.memory_space<vmem>>, vector<1x8x32xf32>
    %5 = vector.shape_cast %4 : vector<1x8x32xf32> to vector<8x32xf32>
    %6 = arith.truncf %5 : vector<8x32xf32> to vector<8x32xbf16>
    %c0_7 = arith.constant 0 : index
    %c0_8 = arith.constant 0 : index
    %c0_9 = arith.constant 0 : index
    %7 = vector.load %arg3[%c0_7, %c0_8, %c0_9] : memref<1x8x32xf32, #tpu.memory_space<vmem>>, vector<1x8x32xf32>
    %8 = vector.shape_cast %7 : vector<1x8x32xf32> to vector<8x32xf32>
    %9 = arith.truncf %8 : vector<8x32xf32> to vector<8x32xbf16>
    %c0_10 = arith.constant 0 : index
    %c0_11 = arith.constant 0 : index
    %10 = vector.load %arg4[%c0_10, %c0_11] : memref<32x32xbf16, #tpu.memory_space<vmem>>, vector<32x32xbf16>
    %cst = arith.constant dense<0.000000e+00> : vector<8x32xf32>
    %11 = tpu.matmul %3, %10, %cst {dimension_numbers = #tpu.dot_dimension_numbers<[1], [0], [0], [1], [0, 0, 1, 1], [], []>} : vector<8x32xbf16>, vector<32x32xbf16>, vector<8x32xf32> -> vector<8x32xf32>
    %12 = vector.extract_strided_slice %0 {offsets = [0, 0], sizes = [1, 32], strides = [1, 1]} : vector<3x32xf32> to vector<1x32xf32>
    %13 = vector.broadcast %12 : vector<1x32xf32> to vector<8x32xf32>
    %14 = arith.addf %11, %13 : vector<8x32xf32>
    %c0_12 = arith.constant 0 : index
    %c0_13 = arith.constant 0 : index
    %15 = vector.load %arg5[%c0_12, %c0_13] : memref<32x32xbf16, #tpu.memory_space<vmem>>, vector<32x32xbf16>
    %cst_14 = arith.constant dense<0.000000e+00> : vector<8x32xf32>
    %16 = tpu.matmul %6, %15, %cst_14 {dimension_numbers = #tpu.dot_dimension_numbers<[1], [0], [0], [1], [0, 0, 1, 1], [], []>} : vector<8x32xbf16>, vector<32x32xbf16>, vector<8x32xf32> -> vector<8x32xf32>
    %17 = vector.extract_strided_slice %0 {offsets = [1, 0], sizes = [1, 32], strides = [1, 1]} : vector<3x32xf32> to vector<1x32xf32>
    %18 = vector.broadcast %17 : vector<1x32xf32> to vector<8x32xf32>
    %19 = arith.addf %16, %18 : vector<8x32xf32>
    %c0_15 = arith.constant 0 : index
    %c0_16 = arith.constant 0 : index
    %20 = vector.load %arg6[%c0_15, %c0_16] : memref<32x32xbf16, #tpu.memory_space<vmem>>, vector<32x32xbf16>
    %cst_17 = arith.constant dense<0.000000e+00> : vector<8x32xf32>
    %21 = tpu.matmul %9, %20, %cst_17 {dimension_numbers = #tpu.dot_dimension_numbers<[1], [0], [0], [1], [0, 0, 1, 1], [], []>} : vector<8x32xbf16>, vector<32x32xbf16>, vector<8x32xf32> -> vector<8x32xf32>
    %22 = vector.extract_strided_slice %0 {offsets = [2, 0], sizes = [1, 32], strides = [1, 1]} : vector<3x32xf32> to vector<1x32xf32>
    %23 = vector.broadcast %22 : vector<1x32xf32> to vector<8x32xf32>
    %24 = arith.addf %21, %23 : vector<8x32xf32>
    %25 = arith.truncf %14 : vector<8x32xf32> to vector<8x32xbf16>
    %c0_18 = arith.constant 0 : index
    %c0_19 = arith.constant 0 : index
    %c0_20 = arith.constant 0 : index
    %26 = vector.load %arg8[%c0_18, %c0_19, %c0_20] : memref<1x8x32xbf16, #tpu.memory_space<vmem>>, vector<1x8x32xbf16>
    %27 = vector.shape_cast %26 : vector<1x8x32xbf16> to vector<8x32xbf16>
    %28 = vector.shape_cast %25 : vector<8x32xbf16> to vector<1x8x32xbf16>
    tpu.vector_store %arg8[%c0_18, %c0_19, %c0_20], %28 {strides = array<i32>} : memref<1x8x32xbf16, #tpu.memory_space<vmem>>, vector<1x8x32xbf16>,
    %29 = arith.truncf %19 : vector<8x32xf32> to vector<8x32xbf16>
    %c0_21 = arith.constant 0 : index
    %c0_22 = arith.constant 0 : index
    %c0_23 = arith.constant 0 : index
    %30 = vector.load %arg9[%c0_21, %c0_22, %c0_23] : memref<1x8x32xbf16, #tpu.memory_space<vmem>>, vector<1x8x32xbf16>
    %31 = vector.shape_cast %30 : vector<1x8x32xbf16> to vector<8x32xbf16>
    %32 = vector.shape_cast %29 : vector<8x32xbf16> to vector<1x8x32xbf16>
    tpu.vector_store %arg9[%c0_21, %c0_22, %c0_23], %32 {strides = array<i32>} : memref<1x8x32xbf16, #tpu.memory_space<vmem>>, vector<1x8x32xbf16>,
    %33 = arith.truncf %24 : vector<8x32xf32> to vector<8x32xbf16>
    %c0_24 = arith.constant 0 : index
    %c0_25 = arith.constant 0 : index
    %c0_26 = arith.constant 0 : index
    %34 = vector.load %arg10[%c0_24, %c0_25, %c0_26] : memref<1x8x32xbf16, #tpu.memory_space<vmem>>, vector<1x8x32xbf16>
    %35 = vector.shape_cast %34 : vector<1x8x32xbf16> to vector<8x32xbf16>
    %36 = vector.shape_cast %33 : vector<8x32xbf16> to vector<1x8x32xbf16>
    tpu.vector_store %arg10[%c0_24, %c0_25, %c0_26], %36 {strides = array<i32>} : memref<1x8x32xbf16, #tpu.memory_space<vmem>>, vector<1x8x32xbf16>,
    %37 = vector.extract_strided_slice %19 {offsets = [0, 0], sizes = [8, 8], strides = [1, 1]} : vector<8x32xf32> to vector<8x8xf32>
    %c0_27 = arith.constant 0 : index
    %c0_28 = arith.constant 0 : index
    %c0_29 = arith.constant 0 : index
    %c0_30 = arith.constant 0 : index
    %38 = vector.load %arg11[%c0_27, %c0_28, %c0_29, %c0_30] : memref<1x4x8x16xf32, #tpu.memory_space<vmem>>, vector<1x1x8x8xf32>
    %39 = vector.shape_cast %38 : vector<1x1x8x8xf32> to vector<8x8xf32>
    %40 = vector.shape_cast %37 : vector<8x8xf32> to vector<1x1x8x8xf32>
    tpu.vector_store %arg11[%c0_27, %c0_28, %c0_29, %c0_30], %40 {strides = array<i32>} : memref<1x4x8x16xf32, #tpu.memory_space<vmem>>, vector<1x1x8x8xf32>,
    %41 = vector.extract_strided_slice %24 {offsets = [0, 0], sizes = [8, 8], strides = [1, 1]} : vector<8x32xf32> to vector<8x8xf32>
    %c0_31 = arith.constant 0 : index
    %c0_32 = arith.constant 0 : index
    %c0_33 = arith.constant 0 : index
    %c8 = arith.constant 8 : index
    %42 = vector.load %arg11[%c0_31, %c0_32, %c0_33, %c8] : memref<1x4x8x16xf32, #tpu.memory_space<vmem>>, vector<1x1x8x8xf32>
    %43 = vector.shape_cast %42 : vector<1x1x8x8xf32> to vector<8x8xf32>
    %44 = vector.shape_cast %41 : vector<8x8xf32> to vector<1x1x8x8xf32>
    tpu.vector_store %arg11[%c0_31, %c0_32, %c0_33, %c8], %44 {strides = array<i32>} : memref<1x4x8x16xf32, #tpu.memory_space<vmem>>, vector<1x1x8x8xf32>,
    %45 = vector.extract_strided_slice %19 {offsets = [0, 8], sizes = [8, 8], strides = [1, 1]} : vector<8x32xf32> to vector<8x8xf32>
    %c0_34 = arith.constant 0 : index
    %c1 = arith.constant 1 : index
    %c0_35 = arith.constant 0 : index
    %c0_36 = arith.constant 0 : index
    %46 = vector.load %arg11[%c0_34, %c1, %c0_35, %c0_36] : memref<1x4x8x16xf32, #tpu.memory_space<vmem>>, vector<1x1x8x8xf32>
    %47 = vector.shape_cast %46 : vector<1x1x8x8xf32> to vector<8x8xf32>
    %48 = vector.shape_cast %45 : vector<8x8xf32> to vector<1x1x8x8xf32>
    tpu.vector_store %arg11[%c0_34, %c1, %c0_35, %c0_36], %48 {strides = array<i32>} : memref<1x4x8x16xf32, #tpu.memory_space<vmem>>, vector<1x1x8x8xf32>,
    %49 = vector.extract_strided_slice %24 {offsets = [0, 8], sizes = [8, 8], strides = [1, 1]} : vector<8x32xf32> to vector<8x8xf32>
    %c0_37 = arith.constant 0 : index
    %c1_38 = arith.constant 1 : index
    %c0_39 = arith.constant 0 : index
    %c8_40 = arith.constant 8 : index
    %50 = vector.load %arg11[%c0_37, %c1_38, %c0_39, %c8_40] : memref<1x4x8x16xf32, #tpu.memory_space<vmem>>, vector<1x1x8x8xf32>
    %51 = vector.shape_cast %50 : vector<1x1x8x8xf32> to vector<8x8xf32>
    %52 = vector.shape_cast %49 : vector<8x8xf32> to vector<1x1x8x8xf32>
    tpu.vector_store %arg11[%c0_37, %c1_38, %c0_39, %c8_40], %52 {strides = array<i32>} : memref<1x4x8x16xf32, #tpu.memory_space<vmem>>, vector<1x1x8x8xf32>,
    %53 = vector.extract_strided_slice %19 {offsets = [0, 16], sizes = [8, 8], strides = [1, 1]} : vector<8x32xf32> to vector<8x8xf32>
    %c0_41 = arith.constant 0 : index
    %c2 = arith.constant 2 : index
    %c0_42 = arith.constant 0 : index
    %c0_43 = arith.constant 0 : index
    %54 = vector.load %arg11[%c0_41, %c2, %c0_42, %c0_43] : memref<1x4x8x16xf32, #tpu.memory_space<vmem>>, vector<1x1x8x8xf32>
    %55 = vector.shape_cast %54 : vector<1x1x8x8xf32> to vector<8x8xf32>
    %56 = vector.shape_cast %53 : vector<8x8xf32> to vector<1x1x8x8xf32>
    tpu.vector_store %arg11[%c0_41, %c2, %c0_42, %c0_43], %56 {strides = array<i32>} : memref<1x4x8x16xf32, #tpu.memory_space<vmem>>, vector<1x1x8x8xf32>,
    %57 = vector.extract_strided_slice %24 {offsets = [0, 16], sizes = [8, 8], strides = [1, 1]} : vector<8x32xf32> to vector<8x8xf32>
    %c0_44 = arith.constant 0 : index
    %c2_45 = arith.constant 2 : index
    %c0_46 = arith.constant 0 : index
    %c8_47 = arith.constant 8 : index
    %58 = vector.load %arg11[%c0_44, %c2_45, %c0_46, %c8_47] : memref<1x4x8x16xf32, #tpu.memory_space<vmem>>, vector<1x1x8x8xf32>
    %59 = vector.shape_cast %58 : vector<1x1x8x8xf32> to vector<8x8xf32>
    %60 = vector.shape_cast %57 : vector<8x8xf32> to vector<1x1x8x8xf32>
    tpu.vector_store %arg11[%c0_44, %c2_45, %c0_46, %c8_47], %60 {strides = array<i32>} : memref<1x4x8x16xf32, #tpu.memory_space<vmem>>, vector<1x1x8x8xf32>,
    %61 = vector.extract_strided_slice %19 {offsets = [0, 24], sizes = [8, 8], strides = [1, 1]} : vector<8x32xf32> to vector<8x8xf32>
    %c0_48 = arith.constant 0 : index
    %c3 = arith.constant 3 : index
    %c0_49 = arith.constant 0 : index
    %c0_50 = arith.constant 0 : index
    %62 = vector.load %arg11[%c0_48, %c3, %c0_49, %c0_50] : memref<1x4x8x16xf32, #tpu.memory_space<vmem>>, vector<1x1x8x8xf32>
    %63 = vector.shape_cast %62 : vector<1x1x8x8xf32> to vector<8x8xf32>
    %64 = vector.shape_cast %61 : vector<8x8xf32> to vector<1x1x8x8xf32>
    tpu.vector_store %arg11[%c0_48, %c3, %c0_49, %c0_50], %64 {strides = array<i32>} : memref<1x4x8x16xf32, #tpu.memory_space<vmem>>, vector<1x1x8x8xf32>,
    %65 = vector.extract_strided_slice %24 {offsets = [0, 24], sizes = [8, 8], strides = [1, 1]} : vector<8x32xf32> to vector<8x8xf32>
    %c0_51 = arith.constant 0 : index
    %c3_52 = arith.constant 3 : index
    %c0_53 = arith.constant 0 : index
    %c8_54 = arith.constant 8 : index
    %66 = vector.load %arg11[%c0_51, %c3_52, %c0_53, %c8_54] : memref<1x4x8x16xf32, #tpu.memory_space<vmem>>, vector<1x1x8x8xf32>
    %67 = vector.shape_cast %66 : vector<1x1x8x8xf32> to vector<8x8xf32>
    %68 = vector.shape_cast %65 : vector<8x8xf32> to vector<1x1x8x8xf32>
    tpu.vector_store %arg11[%c0_51, %c3_52, %c0_53, %c8_54], %68 {strides = array<i32>} : memref<1x4x8x16xf32, #tpu.memory_space<vmem>>, vector<1x1x8x8xf32>,
    return
  }
  func.func @transform_0(%arg0: i32) -> (i32, i32, i32) {
    %c0_i32 = arith.constant 0 : i32
    %c0_i32_0 = arith.constant 0 : i32
    %c0_i32_1 = arith.constant 0 : i32
    return %arg0, %c0_i32, %c0_i32_0 : i32, i32, i32
  }
  func.func @transform_1(%arg0: i32) -> (i32, i32, i32) {
    %c0_i32 = arith.constant 0 : i32
    %c0_i32_0 = arith.constant 0 : i32
    %c0_i32_1 = arith.constant 0 : i32
    return %arg0, %c0_i32, %c0_i32_0 : i32, i32, i32
  }
  func.func @transform_2(%arg0: i32) -> (i32, i32, i32) {
    %c0_i32 = arith.constant 0 : i32
    %c0_i32_0 = arith.constant 0 : i32
    %c0_i32_1 = arith.constant 0 : i32
    return %arg0, %c0_i32, %c0_i32_0 : i32, i32, i32
  }
  func.func @transform_3(%arg0: i32) -> (i32, i32) {
    %c0_i32 = arith.constant 0 : i32
    %c0_i32_0 = arith.constant 0 : i32
    %c0_i32_1 = arith.constant 0 : i32
    return %c0_i32, %c0_i32_0 : i32, i32
  }
  func.func @transform_4(%arg0: i32) -> (i32, i32) {
    %c0_i32 = arith.constant 0 : i32
    %c0_i32_0 = arith.constant 0 : i32
    %c0_i32_1 = arith.constant 0 : i32
    return %c0_i32, %c0_i32_0 : i32, i32
  }
  func.func @transform_5(%arg0: i32) -> (i32, i32) {
    %c0_i32 = arith.constant 0 : i32
    %c0_i32_0 = arith.constant 0 : i32
    %c0_i32_1 = arith.constant 0 : i32
    return %c0_i32, %c0_i32_0 : i32, i32
  }
  func.func @transform_6(%arg0: i32) -> (i32, i32) {
    %c0_i32 = arith.constant 0 : i32
    %c0_i32_0 = arith.constant 0 : i32
    %c0_i32_1 = arith.constant 0 : i32
    return %c0_i32, %c0_i32_0 : i32, i32
  }
  func.func @transform_7(%arg0: i32) -> (i32, i32, i32) {
    %c0_i32 = arith.constant 0 : i32
    %c0_i32_0 = arith.constant 0 : i32
    %c0_i32_1 = arith.constant 0 : i32
    return %arg0, %c0_i32, %c0_i32_0 : i32, i32, i32
  }
  func.func @transform_8(%arg0: i32) -> (i32, i32, i32) {
    %c0_i32 = arith.constant 0 : i32
    %c0_i32_0 = arith.constant 0 : i32
    %c0_i32_1 = arith.constant 0 : i32
    return %arg0, %c0_i32, %c0_i32_0 : i32, i32, i32
  }
  func.func @transform_9(%arg0: i32) -> (i32, i32, i32) {
    %c0_i32 = arith.constant 0 : i32
    %c0_i32_0 = arith.constant 0 : i32
    %c0_i32_1 = arith.constant 0 : i32
    return %arg0, %c0_i32, %c0_i32_0 : i32, i32, i32
  }
  func.func @transform_10(%arg0: i32) -> (i32, i32, i32, i32) {
    %c0_i32 = arith.constant 0 : i32
    %c0_i32_0 = arith.constant 0 : i32
    %c0_i32_1 = arith.constant 0 : i32
    %c0_i32_2 = arith.constant 0 : i32
    return %arg0, %c0_i32, %c0_i32_0, %c0_i32_1 : i32, i32, i32, i32
  }
}

module attributes {stable_mosaic.version = 11 : i64} {
  func.func @_attn_kernel(%arg0: i32, %arg1: i32, %arg2: memref<1x8x32xbf16, #tpu.memory_space<vmem>>, %arg3: memref<1x8x32xbf16, #tpu.memory_space<vmem>>, %arg4: memref<1x8x32xbf16, #tpu.memory_space<vmem>>, %arg5: memref<8x32xbf16, #tpu.memory_space<vmem>>, %arg6: memref<4x32xbf16, #tpu.memory_space<vmem>>, %arg7: memref<4x8xf32, #tpu.memory_space<vmem>>, %arg8: memref<1x1x8xf32, #tpu.memory_space<vmem>>, %arg9: memref<32x32xbf16, #tpu.memory_space<vmem>>, %arg10: memref<1x32xf32, #tpu.memory_space<vmem>>, %arg11: memref<1x8x32xf32, #tpu.memory_space<vmem>>, %arg12: memref<8x32xf32, #tpu.memory_space<vmem>>) attributes {dimension_semantics = [#tpu.dimension_semantics<parallel>, #tpu.dimension_semantics<parallel>], iteration_bounds = array<i64: 2, 1>, scalar_prefetch = 0 : i64, scratch_operands = 1 : i64, tpu.core_type = #tpu.core_type<tc>, window_params = [{transform_indices = @transform_0, window_bounds = array<i64: 1, 8, 32>}, {transform_indices = @transform_1, window_bounds = array<i64: 1, 8, 32>}, {transform_indices = @transform_2, window_bounds = array<i64: 1, 8, 32>}, {pipeline_mode = #tpu.pipeline_mode<synchronous>, transform_indices = @transform_3, window_bounds = array<i64: 8, 32>}, {pipeline_mode = #tpu.pipeline_mode<synchronous>, transform_indices = @transform_4, window_bounds = array<i64: 4, 32>}, {pipeline_mode = #tpu.pipeline_mode<synchronous>, transform_indices = @transform_5, window_bounds = array<i64: 4, 8>}, {transform_indices = @transform_6, window_bounds = array<i64: 1, 1, 8>}, {pipeline_mode = #tpu.pipeline_mode<synchronous>, transform_indices = @transform_7, window_bounds = array<i64: 32, 32>}, {pipeline_mode = #tpu.pipeline_mode<synchronous>, transform_indices = @transform_8, window_bounds = array<i64: 1, 32>}, {transform_indices = @transform_9, window_bounds = array<i64: 1, 8, 32>}]} {
    %c0 = arith.constant 0 : index
    %c0_0 = arith.constant 0 : index
    %c0_1 = arith.constant 0 : index
    %0 = vector.load %arg2[%c0, %c0_0, %c0_1] : memref<1x8x32xbf16, #tpu.memory_space<vmem>>, vector<1x8x32xbf16>
    %1 = vector.shape_cast %0 : vector<1x8x32xbf16> to vector<8x32xbf16>
    %c0_2 = arith.constant 0 : index
    %c0_3 = arith.constant 0 : index
    %c0_4 = arith.constant 0 : index
    %2 = vector.load %arg8[%c0_2, %c0_3, %c0_4] : memref<1x1x8xf32, #tpu.memory_space<vmem>>, vector<1x1x8xf32>
    %3 = vector.shape_cast %2 : vector<1x1x8xf32> to vector<1x8xf32>
    %cst = arith.constant 1.000000e+00 : f32
    %4 = vector.broadcast %cst : f32 to vector<1x8xf32>
    %5 = arith.subf %3, %4 : vector<1x8xf32>
    %cst_5 = arith.constant 1.000000e+30 : f32
    %6 = vector.broadcast %cst_5 : f32 to vector<1x8xf32>
    %7 = arith.mulf %5, %6 : vector<1x8xf32>
    %c0_6 = arith.constant 0 : index
    %c0_7 = arith.constant 0 : index
    %c0_8 = arith.constant 0 : index
    %8 = vector.load %arg3[%c0_6, %c0_7, %c0_8] : memref<1x8x32xbf16, #tpu.memory_space<vmem>>, vector<1x8x32xbf16>
    %9 = vector.shape_cast %8 : vector<1x8x32xbf16> to vector<8x32xbf16>
    %10 = arith.extf %9 : vector<8x32xbf16> to vector<8x32xf32>
    %c0_9 = arith.constant 0 : index
    %c0_10 = arith.constant 0 : index
    %11 = vector.load %arg5[%c0_9, %c0_10] : memref<8x32xbf16, #tpu.memory_space<vmem>>, vector<8x32xbf16>
    %12 = arith.extf %11 : vector<8x32xbf16> to vector<8x32xf32>
    %13 = arith.addf %10, %12 : vector<8x32xf32>
    %14 = tpu.transpose %13, [1, 0] : vector<8x32xf32> -> vector<32x8xf32>
    %15 = arith.truncf %14 : vector<32x8xf32> to vector<32x8xbf16>
    %c0_11 = arith.constant 0 : index
    %c0_12 = arith.constant 0 : index
    %16 = vector.load %arg6[%c0_11, %c0_12] : memref<4x32xbf16, #tpu.memory_space<vmem>>, vector<4x32xbf16>
    %cst_13 = arith.constant dense<0.000000e+00> : vector<4x8xf32>
    %17 = tpu.matmul %16, %15, %cst_13 {dimension_numbers = #tpu.dot_dimension_numbers<[1], [0], [0], [1], [0, 0, 1, 1], [], []>} : vector<4x32xbf16>, vector<32x8xbf16>, vector<4x8xf32> -> vector<4x8xf32>
    %c0_14 = arith.constant 0 : index
    %c0_15 = arith.constant 0 : index
    %18 = vector.load %arg7[%c0_14, %c0_15] : memref<4x8xf32, #tpu.memory_space<vmem>>, vector<4x8xf32>
    %19 = arith.addf %17, %18 : vector<4x8xf32>
    %20 = vector.extract_strided_slice %1 {offsets = [0, 0], sizes = [8, 8], strides = [1, 1]} : vector<8x32xbf16> to vector<8x8xbf16>
    %21 = vector.extract_strided_slice %15 {offsets = [0, 0], sizes = [8, 8], strides = [1, 1]} : vector<32x8xbf16> to vector<8x8xbf16>
    %cst_16 = arith.constant dense<0.000000e+00> : vector<8x8xf32>
    %22 = tpu.matmul %20, %21, %cst_16 {dimension_numbers = #tpu.dot_dimension_numbers<[1], [0], [0], [1], [0, 0, 1, 1], [], []>} : vector<8x8xbf16>, vector<8x8xbf16>, vector<8x8xf32> -> vector<8x8xf32>
    %23 = vector.extract_strided_slice %19 {offsets = [0, 0], sizes = [1, 8], strides = [1, 1]} : vector<4x8xf32> to vector<1x8xf32>
    %24 = vector.broadcast %23 : vector<1x8xf32> to vector<8x8xf32>
    %25 = arith.addf %22, %24 : vector<8x8xf32>
    %26 = vector.broadcast %7 : vector<1x8xf32> to vector<8x8xf32>
    %27 = arith.addf %25, %26 : vector<8x8xf32>
    %cst_17 = arith.constant dense<0xFF800000> : vector<8xf32>
    %28 = vector.multi_reduction <maximumf>, %27, %cst_17 [1] : vector<8x8xf32> to vector<8xf32>
    %29 = vector.shape_cast %28 : vector<8xf32> to vector<8x1xf32>
    %30 = vector.broadcast %29 : vector<8x1xf32> to vector<8x8xf32>
    %31 = arith.subf %27, %30 : vector<8x8xf32>
    %32 = math.exp %31 : vector<8x8xf32>
    %cst_18 = arith.constant dense<0.000000e+00> : vector<8xf32>
    %33 = vector.multi_reduction <add>, %32, %cst_18 [1] : vector<8x8xf32> to vector<8xf32>
    %34 = vector.shape_cast %33 : vector<8xf32> to vector<8x1xf32>
    %35 = tpu.reciprocal %34 {approx = true} : vector<8x1xf32> -> vector<8x1xf32>
    %36 = vector.broadcast %35 : vector<8x1xf32> to vector<8x8xf32>
    %37 = arith.mulf %32, %36 : vector<8x8xf32>
    %38 = vector.broadcast %3 : vector<1x8xf32> to vector<8x8xf32>
    %39 = arith.mulf %37, %38 : vector<8x8xf32>
    %40 = arith.truncf %39 : vector<8x8xf32> to vector<8x8xbf16>
    %c0_19 = arith.constant 0 : index
    %c0_20 = arith.constant 0 : index
    %c0_21 = arith.constant 0 : index
    %41 = vector.load %arg4[%c0_19, %c0_20, %c0_21] : memref<1x8x32xbf16, #tpu.memory_space<vmem>>, vector<1x8x8xbf16>
    %42 = vector.shape_cast %41 : vector<1x8x8xbf16> to vector<8x8xbf16>
    %cst_22 = arith.constant dense<0.000000e+00> : vector<8x8xf32>
    %43 = tpu.matmul %40, %42, %cst_22 {dimension_numbers = #tpu.dot_dimension_numbers<[1], [0], [0], [1], [0, 0, 1, 1], [], []>} : vector<8x8xbf16>, vector<8x8xbf16>, vector<8x8xf32> -> vector<8x8xf32>
    %c0_23 = arith.constant 0 : index
    %c0_24 = arith.constant 0 : index
    %44 = vector.load %arg12[%c0_23, %c0_24] : memref<8x32xf32, #tpu.memory_space<vmem>>, vector<8x8xf32>
    tpu.vector_store %arg12[%c0_23, %c0_24], %43 {strides = array<i32>} : memref<8x32xf32, #tpu.memory_space<vmem>>, vector<8x8xf32>,
    %45 = vector.extract_strided_slice %1 {offsets = [0, 8], sizes = [8, 8], strides = [1, 1]} : vector<8x32xbf16> to vector<8x8xbf16>
    %46 = vector.extract_strided_slice %15 {offsets = [8, 0], sizes = [8, 8], strides = [1, 1]} : vector<32x8xbf16> to vector<8x8xbf16>
    %cst_25 = arith.constant dense<0.000000e+00> : vector<8x8xf32>
    %47 = tpu.matmul %45, %46, %cst_25 {dimension_numbers = #tpu.dot_dimension_numbers<[1], [0], [0], [1], [0, 0, 1, 1], [], []>} : vector<8x8xbf16>, vector<8x8xbf16>, vector<8x8xf32> -> vector<8x8xf32>
    %48 = vector.extract_strided_slice %19 {offsets = [1, 0], sizes = [1, 8], strides = [1, 1]} : vector<4x8xf32> to vector<1x8xf32>
    %49 = vector.broadcast %48 : vector<1x8xf32> to vector<8x8xf32>
    %50 = arith.addf %47, %49 : vector<8x8xf32>
    %51 = vector.broadcast %7 : vector<1x8xf32> to vector<8x8xf32>
    %52 = arith.addf %50, %51 : vector<8x8xf32>
    %cst_26 = arith.constant dense<0xFF800000> : vector<8xf32>
    %53 = vector.multi_reduction <maximumf>, %52, %cst_26 [1] : vector<8x8xf32> to vector<8xf32>
    %54 = vector.shape_cast %53 : vector<8xf32> to vector<8x1xf32>
    %55 = vector.broadcast %54 : vector<8x1xf32> to vector<8x8xf32>
    %56 = arith.subf %52, %55 : vector<8x8xf32>
    %57 = math.exp %56 : vector<8x8xf32>
    %cst_27 = arith.constant dense<0.000000e+00> : vector<8xf32>
    %58 = vector.multi_reduction <add>, %57, %cst_27 [1] : vector<8x8xf32> to vector<8xf32>
    %59 = vector.shape_cast %58 : vector<8xf32> to vector<8x1xf32>
    %60 = tpu.reciprocal %59 {approx = true} : vector<8x1xf32> -> vector<8x1xf32>
    %61 = vector.broadcast %60 : vector<8x1xf32> to vector<8x8xf32>
    %62 = arith.mulf %57, %61 : vector<8x8xf32>
    %63 = vector.broadcast %3 : vector<1x8xf32> to vector<8x8xf32>
    %64 = arith.mulf %62, %63 : vector<8x8xf32>
    %65 = arith.truncf %64 : vector<8x8xf32> to vector<8x8xbf16>
    %c0_28 = arith.constant 0 : index
    %c0_29 = arith.constant 0 : index
    %c8 = arith.constant 8 : index
    %66 = vector.load %arg4[%c0_28, %c0_29, %c8] : memref<1x8x32xbf16, #tpu.memory_space<vmem>>, vector<1x8x8xbf16>
    %67 = vector.shape_cast %66 : vector<1x8x8xbf16> to vector<8x8xbf16>
    %cst_30 = arith.constant dense<0.000000e+00> : vector<8x8xf32>
    %68 = tpu.matmul %65, %67, %cst_30 {dimension_numbers = #tpu.dot_dimension_numbers<[1], [0], [0], [1], [0, 0, 1, 1], [], []>} : vector<8x8xbf16>, vector<8x8xbf16>, vector<8x8xf32> -> vector<8x8xf32>
    %c0_31 = arith.constant 0 : index
    %c8_32 = arith.constant 8 : index
    %69 = vector.load %arg12[%c0_31, %c8_32] : memref<8x32xf32, #tpu.memory_space<vmem>>, vector<8x8xf32>
    tpu.vector_store %arg12[%c0_31, %c8_32], %68 {strides = array<i32>} : memref<8x32xf32, #tpu.memory_space<vmem>>, vector<8x8xf32>,
    %70 = vector.extract_strided_slice %1 {offsets = [0, 16], sizes = [8, 8], strides = [1, 1]} : vector<8x32xbf16> to vector<8x8xbf16>
    %71 = vector.extract_strided_slice %15 {offsets = [16, 0], sizes = [8, 8], strides = [1, 1]} : vector<32x8xbf16> to vector<8x8xbf16>
    %cst_33 = arith.constant dense<0.000000e+00> : vector<8x8xf32>
    %72 = tpu.matmul %70, %71, %cst_33 {dimension_numbers = #tpu.dot_dimension_numbers<[1], [0], [0], [1], [0, 0, 1, 1], [], []>} : vector<8x8xbf16>, vector<8x8xbf16>, vector<8x8xf32> -> vector<8x8xf32>
    %73 = vector.extract_strided_slice %19 {offsets = [2, 0], sizes = [1, 8], strides = [1, 1]} : vector<4x8xf32> to vector<1x8xf32>
    %74 = vector.broadcast %73 : vector<1x8xf32> to vector<8x8xf32>
    %75 = arith.addf %72, %74 : vector<8x8xf32>
    %76 = vector.broadcast %7 : vector<1x8xf32> to vector<8x8xf32>
    %77 = arith.addf %75, %76 : vector<8x8xf32>
    %cst_34 = arith.constant dense<0xFF800000> : vector<8xf32>
    %78 = vector.multi_reduction <maximumf>, %77, %cst_34 [1] : vector<8x8xf32> to vector<8xf32>
    %79 = vector.shape_cast %78 : vector<8xf32> to vector<8x1xf32>
    %80 = vector.broadcast %79 : vector<8x1xf32> to vector<8x8xf32>
    %81 = arith.subf %77, %80 : vector<8x8xf32>
    %82 = math.exp %81 : vector<8x8xf32>
    %cst_35 = arith.constant dense<0.000000e+00> : vector<8xf32>
    %83 = vector.multi_reduction <add>, %82, %cst_35 [1] : vector<8x8xf32> to vector<8xf32>
    %84 = vector.shape_cast %83 : vector<8xf32> to vector<8x1xf32>
    %85 = tpu.reciprocal %84 {approx = true} : vector<8x1xf32> -> vector<8x1xf32>
    %86 = vector.broadcast %85 : vector<8x1xf32> to vector<8x8xf32>
    %87 = arith.mulf %82, %86 : vector<8x8xf32>
    %88 = vector.broadcast %3 : vector<1x8xf32> to vector<8x8xf32>
    %89 = arith.mulf %87, %88 : vector<8x8xf32>
    %90 = arith.truncf %89 : vector<8x8xf32> to vector<8x8xbf16>
    %c0_36 = arith.constant 0 : index
    %c0_37 = arith.constant 0 : index
    %c16 = arith.constant 16 : index
    %91 = vector.load %arg4[%c0_36, %c0_37, %c16] : memref<1x8x32xbf16, #tpu.memory_space<vmem>>, vector<1x8x8xbf16>
    %92 = vector.shape_cast %91 : vector<1x8x8xbf16> to vector<8x8xbf16>
    %cst_38 = arith.constant dense<0.000000e+00> : vector<8x8xf32>
    %93 = tpu.matmul %90, %92, %cst_38 {dimension_numbers = #tpu.dot_dimension_numbers<[1], [0], [0], [1], [0, 0, 1, 1], [], []>} : vector<8x8xbf16>, vector<8x8xbf16>, vector<8x8xf32> -> vector<8x8xf32>
    %c0_39 = arith.constant 0 : index
    %c16_40 = arith.constant 16 : index
    %94 = vector.load %arg12[%c0_39, %c16_40] : memref<8x32xf32, #tpu.memory_space<vmem>>, vector<8x8xf32>
    tpu.vector_store %arg12[%c0_39, %c16_40], %93 {strides = array<i32>} : memref<8x32xf32, #tpu.memory_space<vmem>>, vector<8x8xf32>,
    %95 = vector.extract_strided_slice %1 {offsets = [0, 24], sizes = [8, 8], strides = [1, 1]} : vector<8x32xbf16> to vector<8x8xbf16>
    %96 = vector.extract_strided_slice %15 {offsets = [24, 0], sizes = [8, 8], strides = [1, 1]} : vector<32x8xbf16> to vector<8x8xbf16>
    %cst_41 = arith.constant dense<0.000000e+00> : vector<8x8xf32>
    %97 = tpu.matmul %95, %96, %cst_41 {dimension_numbers = #tpu.dot_dimension_numbers<[1], [0], [0], [1], [0, 0, 1, 1], [], []>} : vector<8x8xbf16>, vector<8x8xbf16>, vector<8x8xf32> -> vector<8x8xf32>
    %98 = vector.extract_strided_slice %19 {offsets = [3, 0], sizes = [1, 8], strides = [1, 1]} : vector<4x8xf32> to vector<1x8xf32>
    %99 = vector.broadcast %98 : vector<1x8xf32> to vector<8x8xf32>
    %100 = arith.addf %97, %99 : vector<8x8xf32>
    %101 = vector.broadcast %7 : vector<1x8xf32> to vector<8x8xf32>
    %102 = arith.addf %100, %101 : vector<8x8xf32>
    %cst_42 = arith.constant dense<0xFF800000> : vector<8xf32>
    %103 = vector.multi_reduction <maximumf>, %102, %cst_42 [1] : vector<8x8xf32> to vector<8xf32>
    %104 = vector.shape_cast %103 : vector<8xf32> to vector<8x1xf32>
    %105 = vector.broadcast %104 : vector<8x1xf32> to vector<8x8xf32>
    %106 = arith.subf %102, %105 : vector<8x8xf32>
    %107 = math.exp %106 : vector<8x8xf32>
    %cst_43 = arith.constant dense<0.000000e+00> : vector<8xf32>
    %108 = vector.multi_reduction <add>, %107, %cst_43 [1] : vector<8x8xf32> to vector<8xf32>
    %109 = vector.shape_cast %108 : vector<8xf32> to vector<8x1xf32>
    %110 = tpu.reciprocal %109 {approx = true} : vector<8x1xf32> -> vector<8x1xf32>
    %111 = vector.broadcast %110 : vector<8x1xf32> to vector<8x8xf32>
    %112 = arith.mulf %107, %111 : vector<8x8xf32>
    %113 = vector.broadcast %3 : vector<1x8xf32> to vector<8x8xf32>
    %114 = arith.mulf %112, %113 : vector<8x8xf32>
    %115 = arith.truncf %114 : vector<8x8xf32> to vector<8x8xbf16>
    %c0_44 = arith.constant 0 : index
    %c0_45 = arith.constant 0 : index
    %c24 = arith.constant 24 : index
    %116 = vector.load %arg4[%c0_44, %c0_45, %c24] : memref<1x8x32xbf16, #tpu.memory_space<vmem>>, vector<1x8x8xbf16>
    %117 = vector.shape_cast %116 : vector<1x8x8xbf16> to vector<8x8xbf16>
    %cst_46 = arith.constant dense<0.000000e+00> : vector<8x8xf32>
    %118 = tpu.matmul %115, %117, %cst_46 {dimension_numbers = #tpu.dot_dimension_numbers<[1], [0], [0], [1], [0, 0, 1, 1], [], []>} : vector<8x8xbf16>, vector<8x8xbf16>, vector<8x8xf32> -> vector<8x8xf32>
    %c0_47 = arith.constant 0 : index
    %c24_48 = arith.constant 24 : index
    %119 = vector.load %arg12[%c0_47, %c24_48] : memref<8x32xf32, #tpu.memory_space<vmem>>, vector<8x8xf32>
    tpu.vector_store %arg12[%c0_47, %c24_48], %118 {strides = array<i32>} : memref<8x32xf32, #tpu.memory_space<vmem>>, vector<8x8xf32>,
    %c0_49 = arith.constant 0 : index
    %c0_50 = arith.constant 0 : index
    %120 = vector.load %arg12[%c0_49, %c0_50] : memref<8x32xf32, #tpu.memory_space<vmem>>, vector<8x32xf32>
    %121 = arith.truncf %120 : vector<8x32xf32> to vector<8x32xbf16>
    %c0_51 = arith.constant 0 : index
    %c0_52 = arith.constant 0 : index
    %122 = vector.load %arg9[%c0_51, %c0_52] : memref<32x32xbf16, #tpu.memory_space<vmem>>, vector<32x32xbf16>
    %cst_53 = arith.constant dense<0.000000e+00> : vector<8x32xf32>
    %123 = tpu.matmul %121, %122, %cst_53 {dimension_numbers = #tpu.dot_dimension_numbers<[1], [0], [0], [1], [0, 0, 1, 1], [], []>} : vector<8x32xbf16>, vector<32x32xbf16>, vector<8x32xf32> -> vector<8x32xf32>
    %c0_54 = arith.constant 0 : index
    %c0_55 = arith.constant 0 : index
    %124 = vector.load %arg10[%c0_54, %c0_55] : memref<1x32xf32, #tpu.memory_space<vmem>>, vector<1x32xf32>
    %125 = vector.broadcast %124 : vector<1x32xf32> to vector<8x32xf32>
    %126 = arith.addf %123, %125 : vector<8x32xf32>
    %c0_56 = arith.constant 0 : index
    %c0_57 = arith.constant 0 : index
    %c0_58 = arith.constant 0 : index
    %127 = vector.load %arg11[%c0_56, %c0_57, %c0_58] : memref<1x8x32xf32, #tpu.memory_space<vmem>>, vector<1x8x32xf32>
    %128 = vector.shape_cast %127 : vector<1x8x32xf32> to vector<8x32xf32>
    %129 = vector.shape_cast %126 : vector<8x32xf32> to vector<1x8x32xf32>
    tpu.vector_store %arg11[%c0_56, %c0_57, %c0_58], %129 {strides = array<i32>} : memref<1x8x32xf32, #tpu.memory_space<vmem>>, vector<1x8x32xf32>,
    return
  }
  func.func @transform_0(%arg0: i32, %arg1: i32) -> (i32, i32, i32) {
    %c0_i32 = arith.constant 0 : i32
    %c0_i32_0 = arith.constant 0 : i32
    return %arg0, %arg1, %c0_i32 : i32, i32, i32
  }
  func.func @transform_1(%arg0: i32, %arg1: i32) -> (i32, i32, i32) {
    %c0_i32 = arith.constant 0 : i32
    %c0_i32_0 = arith.constant 0 : i32
    %c0_i32_1 = arith.constant 0 : i32
    return %arg0, %c0_i32, %c0_i32_0 : i32, i32, i32
  }
  func.func @transform_2(%arg0: i32, %arg1: i32) -> (i32, i32, i32) {
    %c0_i32 = arith.constant 0 : i32
    %c0_i32_0 = arith.constant 0 : i32
    %c0_i32_1 = arith.constant 0 : i32
    return %arg0, %c0_i32, %c0_i32_0 : i32, i32, i32
  }
  func.func @transform_3(%arg0: i32, %arg1: i32) -> (i32, i32) {
    %c0_i32 = arith.constant 0 : i32
    %c0_i32_0 = arith.constant 0 : i32
    %c0_i32_1 = arith.constant 0 : i32
    return %c0_i32, %c0_i32_0 : i32, i32
  }
  func.func @transform_4(%arg0: i32, %arg1: i32) -> (i32, i32) {
    %c0_i32 = arith.constant 0 : i32
    %c0_i32_0 = arith.constant 0 : i32
    %c0_i32_1 = arith.constant 0 : i32
    return %c0_i32, %c0_i32_0 : i32, i32
  }
  func.func @transform_5(%arg0: i32, %arg1: i32) -> (i32, i32) {
    %c0_i32 = arith.constant 0 : i32
    %c0_i32_0 = arith.constant 0 : i32
    %c0_i32_1 = arith.constant 0 : i32
    return %c0_i32, %c0_i32_0 : i32, i32
  }
  func.func @transform_6(%arg0: i32, %arg1: i32) -> (i32, i32, i32) {
    %c0_i32 = arith.constant 0 : i32
    %c0_i32_0 = arith.constant 0 : i32
    %c0_i32_1 = arith.constant 0 : i32
    return %arg0, %c0_i32, %c0_i32_0 : i32, i32, i32
  }
  func.func @transform_7(%arg0: i32, %arg1: i32) -> (i32, i32) {
    %c0_i32 = arith.constant 0 : i32
    %c0_i32_0 = arith.constant 0 : i32
    %c0_i32_1 = arith.constant 0 : i32
    return %c0_i32, %c0_i32_0 : i32, i32
  }
  func.func @transform_8(%arg0: i32, %arg1: i32) -> (i32, i32) {
    %c0_i32 = arith.constant 0 : i32
    %c0_i32_0 = arith.constant 0 : i32
    %c0_i32_1 = arith.constant 0 : i32
    return %c0_i32, %c0_i32_0 : i32, i32
  }
  func.func @transform_9(%arg0: i32, %arg1: i32) -> (i32, i32, i32) {
    %c0_i32 = arith.constant 0 : i32
    %c0_i32_0 = arith.constant 0 : i32
    return %arg0, %arg1, %c0_i32 : i32, i32, i32
  }
}

</mosaic_0001>

<llo_original>
// kernel: rel_pos_mha_forward.2
$region0: #{rel_pos_mha_forward.2}
  #allocation0 [shape = 'u32[]', space=smem, size = 0x4, offset = 0x4, fixed_abs, tag = 'smem constant byte address 0x4 - core index']
  #allocation1 [shape = 'u32[144,128]{1,0:T(1,128)}', space=vmem, size = 0x12000, scoped, tag = 'internal scratch']
  %s0 = inlined_call_operand.vmem [shape: f32[2,8,32], index: 0, kind: input, shape index: {}]
  %s1 = inlined_call_operand.vmem [shape: f32[2,8,32], index: 1, kind: input, shape index: {}]
  %s2 = inlined_call_operand.vmem [shape: f32[2,8,32], index: 2, kind: input, shape index: {}]
  %s3 = inlined_call_operand.vmem [shape: bf16[32,32], index: 3, kind: input, shape index: {}]
  %s4 = inlined_call_operand.vmem [shape: bf16[32,32], index: 4, kind: input, shape index: {}]
  %s5 = inlined_call_operand.vmem [shape: bf16[32,32], index: 5, kind: input, shape index: {}]
  %s6 = inlined_call_operand.vmem [shape: f32[3,32], index: 6, kind: input, shape index: {}]
  %s7 = inlined_call_operand.vmem [shape: bf16[2,8,32], index: 7, kind: output, shape index: {0}]
  %s8 = inlined_call_operand.vmem [shape: bf16[2,8,32], index: 8, kind: output, shape index: {1}]
  %s9 = inlined_call_operand.vmem [shape: bf16[2,8,32], index: 9, kind: output, shape index: {2}]
  %s10 = inlined_call_operand.hbm [shape: f32[2,4,8,16], index: 10, kind: output, shape index: {3}]
  %11 = xla_tuple %s7, %s8, %s9, %s10
  %s12 = sld [smem:[#allocation0]]
  $region85: #{rel_pos_mha_forward.2} parent=0
    _
  %s14 = ssub.s32 1, %s12
  %s15 = scalar_select 0, %s14, %s12
  $region1: #{rel_pos_mha_forward.2} parent=0
    #allocation2 [shape = 'u8[32768]{0}', space=vmem, size = 0x8000, scoped, tag = 'output window, operand 3']
    #allocation3 [shape = 's32[2]{0}', space=sflag, size = 0x8, scoped, tag = 'scoped memory for rel_pos_mha_forward.2']
    %16 = vsyncpa [#allocation3], 0
    %s17 = scalar_lea.sflag [#allocation3], 1
    %18 = vsyncpa %s17, 0
    loop: start=0, step=1, limit=4
    $region2: #{rel_pos_mha_forward.2} parent=1 // loop_pre_header
      _
    $region3: #{rel_pos_mha_forward.2} parent=1 // loop_header
      %s20 = sphi 0, %s24
      %p21 = scmp.ge.s32.totalorder %s20, 4
      %s30 = sphi 0, %s32
      %s33 = sphi 0, %s30
      %s34 = sphi 0, %s33
      %s50 = sphi 0, %s34
      %s56 = sphi 0, %s58
      %s59 = sphi 0, %s56
      %s60 = sphi 0, %s59
      %s76 = sphi 0, %s60
      %s82 = sphi 0, %s84
      %s85 = sphi 0, %s82
      %s86 = sphi 0, %s85
      %s102 = sphi 0, %s86
      %s106 = sphi 0, %s106
      %s108 = sphi 0, %s106
      %s109 = sphi 0, %s108
      %s123 = sphi 0, %s109
      %s127 = sphi 0, %s127
      %s129 = sphi 0, %s127
      %s130 = sphi 0, %s129
      %s144 = sphi 0, %s130
      %s148 = sphi 0, %s148
      %s150 = sphi 0, %s148
      %s151 = sphi 0, %s150
      %s165 = sphi 0, %s151
      %s169 = sphi 0, %s169
      %s171 = sphi 0, %s169
      %s172 = sphi 0, %s171
      %s186 = sphi 0, %s172
      %s192 = sphi 0, %s194
      %s195 = sphi 0, %s192
      %s196 = sphi 0, %s195
      %s212 = sphi 0, %s196
      %s218 = sphi 0, %s220
      %s221 = sphi 0, %s218
      %s222 = sphi 0, %s221
      %s238 = sphi 0, %s222
      %s244 = sphi 0, %s246
      %s247 = sphi 0, %s244
      %s248 = sphi 0, %s247
      %s264 = sphi 0, %s248
      %s270 = sphi 0, %s272
      %s273 = sphi 0, %s270
      %s274 = sphi 0, %s273
      %s290 = sphi 0, %s274
    $region4: #{rel_pos_mha_forward.2} parent=1 // loop_header_branch
      %23 = sbr.rel (%p21) target = $region8
    $region5: #{rel_pos_mha_forward.2} parent=1 // loop_body
      %s25 = ssub.s32 %s20, 1
      %s26 = ssub.s32 %s20, 2
      %s27 = sadd.s32 %s20, 1
      %s28 = ssub.s32 %s20, %s27
      %p29 = scmp.eq.s32.totalorder %s28, 0
      %s31 = sadd.s32 %s30, 1
      %s32 = scalar_select %p29, %s30, %s31
      %p35 = pneg %p29
      %p36 = scmp.eq.s32.totalorder %s20, 1
      %p37 = por %p35, %p36
      %p38 = scmp.ne.s32.totalorder %s30, %s33
      %p39 = scmp.eq.s32.totalorder %s20, 0
      %p40 = por %p38, %p39
      %p41 = scmp.ne.s32.totalorder %s30, %s33
      %p42 = scmp.eq.s32.totalorder %s25, 1
      %p43 = por %p41, %p42
      %p44 = scmp.ne.s32.totalorder %s33, %s34
      %p45 = scmp.eq.s32.totalorder %s25, 0
      %p46 = por %p44, %p45
      %p47 = scmp.ne.s32.totalorder %s33, %s34
      %p48 = scmp.eq.s32.totalorder %s26, 1
      %p49 = por %p47, %p48
      %p51 = scmp.ne.s32.totalorder %s34, %s50
      %p52 = scmp.eq.s32.totalorder %s26, 0
      %p53 = por %p51, %p52
      %s54 = ssub.s32 %s20, %s27
      %p55 = scmp.eq.s32.totalorder %s54, 0
      %s57 = sadd.s32 %s56, 1
      %s58 = scalar_select %p55, %s56, %s57
      %p61 = pneg %p55
      %p62 = scmp.eq.s32.totalorder %s20, 1
      %p63 = por %p61, %p62
      %p64 = scmp.ne.s32.totalorder %s56, %s59
      %p65 = scmp.eq.s32.totalorder %s20, 0
      %p66 = por %p64, %p65
      %p67 = scmp.ne.s32.totalorder %s56, %s59
      %p68 = scmp.eq.s32.totalorder %s25, 1
      %p69 = por %p67, %p68
      %p70 = scmp.ne.s32.totalorder %s59, %s60
      %p71 = scmp.eq.s32.totalorder %s25, 0
      %p72 = por %p70, %p71
      %p73 = scmp.ne.s32.totalorder %s59, %s60
      %p74 = scmp.eq.s32.totalorder %s26, 1
      %p75 = por %p73, %p74
      %p77 = scmp.ne.s32.totalorder %s60, %s76
      %p78 = scmp.eq.s32.totalorder %s26, 0
      %p79 = por %p77, %p78
      %s80 = ssub.s32 %s20, %s27
      %p81 = scmp.eq.s32.totalorder %s80, 0
      %s83 = sadd.s32 %s82, 1
      %s84 = scalar_select %p81, %s82, %s83
      %p87 = pneg %p81
      %p88 = scmp.eq.s32.totalorder %s20, 1
      %p89 = por %p87, %p88
      %p90 = scmp.ne.s32.totalorder %s82, %s85
      %p91 = scmp.eq.s32.totalorder %s20, 0
      %p92 = por %p90, %p91
      %p93 = scmp.ne.s32.totalorder %s82, %s85
      %p94 = scmp.eq.s32.totalorder %s25, 1
      %p95 = por %p93, %p94
      %p96 = scmp.ne.s32.totalorder %s85, %s86
      %p97 = scmp.eq.s32.totalorder %s25, 0
      %p98 = por %p96, %p97
      %p99 = scmp.ne.s32.totalorder %s85, %s86
      %p100 = scmp.eq.s32.totalorder %s26, 1
      %p101 = por %p99, %p100
      %p103 = scmp.ne.s32.totalorder %s86, %s102
      %p104 = scmp.eq.s32.totalorder %s26, 0
      %p105 = por %p103, %p104
      %s107 = sadd.s32 %s106, 1
      %p110 = scmp.eq.s32.totalorder %s20, 1
      %p111 = scmp.ne.s32.totalorder %s106, %s108
      %p112 = scmp.eq.s32.totalorder %s20, 0
      %p113 = por %p111, %p112
      %p114 = scmp.ne.s32.totalorder %s106, %s108
      %p115 = scmp.eq.s32.totalorder %s25, 1
      %p116 = por %p114, %p115
      %p117 = scmp.ne.s32.totalorder %s108, %s109
      %p118 = scmp.eq.s32.totalorder %s25, 0
      %p119 = por %p117, %p118
      %p120 = scmp.ne.s32.totalorder %s108, %s109
      %p121 = scmp.eq.s32.totalorder %s26, 1
      %p122 = por %p120, %p121
      %p124 = scmp.ne.s32.totalorder %s109, %s123
      %p125 = scmp.eq.s32.totalorder %s26, 0
      %p126 = por %p124, %p125
      %s128 = sadd.s32 %s127, 1
      %p131 = scmp.eq.s32.totalorder %s20, 1
      %p132 = scmp.ne.s32.totalorder %s127, %s129
      %p133 = scmp.eq.s32.totalorder %s20, 0
      %p134 = por %p132, %p133
      %p135 = scmp.ne.s32.totalorder %s127, %s129
      %p136 = scmp.eq.s32.totalorder %s25, 1
      %p137 = por %p135, %p136
      %p138 = scmp.ne.s32.totalorder %s129, %s130
      %p139 = scmp.eq.s32.totalorder %s25, 0
      %p140 = por %p138, %p139
      %p141 = scmp.ne.s32.totalorder %s129, %s130
      %p142 = scmp.eq.s32.totalorder %s26, 1
      %p143 = por %p141, %p142
      %p145 = scmp.ne.s32.totalorder %s130, %s144
      %p146 = scmp.eq.s32.totalorder %s26, 0
      %p147 = por %p145, %p146
      %s149 = sadd.s32 %s148, 1
      %p152 = scmp.eq.s32.totalorder %s20, 1
      %p153 = scmp.ne.s32.totalorder %s148, %s150
      %p154 = scmp.eq.s32.totalorder %s20, 0
      %p155 = por %p153, %p154
      %p156 = scmp.ne.s32.totalorder %s148, %s150
      %p157 = scmp.eq.s32.totalorder %s25, 1
      %p158 = por %p156, %p157
      %p159 = scmp.ne.s32.totalorder %s150, %s151
      %p160 = scmp.eq.s32.totalorder %s25, 0
      %p161 = por %p159, %p160
      %p162 = scmp.ne.s32.totalorder %s150, %s151
      %p163 = scmp.eq.s32.totalorder %s26, 1
      %p164 = por %p162, %p163
      %p166 = scmp.ne.s32.totalorder %s151, %s165
      %p167 = scmp.eq.s32.totalorder %s26, 0
      %p168 = por %p166, %p167
      %s170 = sadd.s32 %s169, 1
      %p173 = scmp.eq.s32.totalorder %s20, 1
      %p174 = scmp.ne.s32.totalorder %s169, %s171
      %p175 = scmp.eq.s32.totalorder %s20, 0
      %p176 = por %p174, %p175
      %p177 = scmp.ne.s32.totalorder %s169, %s171
      %p178 = scmp.eq.s32.totalorder %s25, 1
      %p179 = por %p177, %p178
      %p180 = scmp.ne.s32.totalorder %s171, %s172
      %p181 = scmp.eq.s32.totalorder %s25, 0
      %p182 = por %p180, %p181
      %p183 = scmp.ne.s32.totalorder %s171, %s172
      %p184 = scmp.eq.s32.totalorder %s26, 1
      %p185 = por %p183, %p184
      %p187 = scmp.ne.s32.totalorder %s172, %s186
      %p188 = scmp.eq.s32.totalorder %s26, 0
      %p189 = por %p187, %p188
      %s190 = ssub.s32 %s20, %s27
      %p191 = scmp.eq.s32.totalorder %s190, 0
      %s193 = sadd.s32 %s192, 1
      %s194 = scalar_select %p191, %s192, %s193
      %p197 = pneg %p191
      %p198 = scmp.eq.s32.totalorder %s20, 1
      %p199 = por %p197, %p198
      %p200 = scmp.ne.s32.totalorder %s192, %s195
      %p201 = scmp.eq.s32.totalorder %s20, 0
      %p202 = por %p200, %p201
      %p203 = scmp.ne.s32.totalorder %s192, %s195
      %p204 = scmp.eq.s32.totalorder %s25, 1
      %p205 = por %p203, %p204
      %p206 = scmp.ne.s32.totalorder %s195, %s196
      %p207 = scmp.eq.s32.totalorder %s25, 0
      %p208 = por %p206, %p207
      %p209 = scmp.ne.s32.totalorder %s195, %s196
      %p210 = scmp.eq.s32.totalorder %s26, 1
      %p211 = por %p209, %p210
      %p213 = scmp.ne.s32.totalorder %s196, %s212
      %p214 = scmp.eq.s32.totalorder %s26, 0
      %p215 = por %p213, %p214
      %s216 = ssub.s32 %s20, %s27
      %p217 = scmp.eq.s32.totalorder %s216, 0
      %s219 = sadd.s32 %s218, 1
      %s220 = scalar_select %p217, %s218, %s219
      %p223 = pneg %p217
      %p224 = scmp.eq.s32.totalorder %s20, 1
      %p225 = por %p223, %p224
      %p226 = scmp.ne.s32.totalorder %s218, %s221
      %p227 = scmp.eq.s32.totalorder %s20, 0
      %p228 = por %p226, %p227
      %p229 = scmp.ne.s32.totalorder %s218, %s221
      %p230 = scmp.eq.s32.totalorder %s25, 1
      %p231 = por %p229, %p230
      %p232 = scmp.ne.s32.totalorder %s221, %s222
      %p233 = scmp.eq.s32.totalorder %s25, 0
      %p234 = por %p232, %p233
      %p235 = scmp.ne.s32.totalorder %s221, %s222
      %p236 = scmp.eq.s32.totalorder %s26, 1
      %p237 = por %p235, %p236
      %p239 = scmp.ne.s32.totalorder %s222, %s238
      %p240 = scmp.eq.s32.totalorder %s26, 0
      %p241 = por %p239, %p240
      %s242 = ssub.s32 %s20, %s27
      %p243 = scmp.eq.s32.totalorder %s242, 0
      %s245 = sadd.s32 %s244, 1
      %s246 = scalar_select %p243, %s244, %s245
      %p249 = pneg %p243
      %p250 = scmp.eq.s32.totalorder %s20, 1
      %p251 = por %p249, %p250
      %p252 = scmp.ne.s32.totalorder %s244, %s247
      %p253 = scmp.eq.s32.totalorder %s20, 0
      %p254 = por %p252, %p253
      %p255 = scmp.ne.s32.totalorder %s244, %s247
      %p256 = scmp.eq.s32.totalorder %s25, 1
      %p257 = por %p255, %p256
      %p258 = scmp.ne.s32.totalorder %s247, %s248
      %p259 = scmp.eq.s32.totalorder %s25, 0
      %p260 = por %p258, %p259
      %p261 = scmp.ne.s32.totalorder %s247, %s248
      %p262 = scmp.eq.s32.totalorder %s26, 1
      %p263 = por %p261, %p262
      %p265 = scmp.ne.s32.totalorder %s248, %s264
      %p266 = scmp.eq.s32.totalorder %s26, 0
      %p267 = por %p265, %p266
      %s268 = ssub.s32 %s20, %s27
      %p269 = scmp.eq.s32.totalorder %s268, 0
      %s271 = sadd.s32 %s270, 1
      %s272 = scalar_select %p269, %s270, %s271
      %p275 = pneg %p269
      %p276 = scmp.eq.s32.totalorder %s20, 1
      %p277 = por %p275, %p276
      %p278 = scmp.ne.s32.totalorder %s270, %s273
      %p279 = scmp.eq.s32.totalorder %s20, 0
      %p280 = por %p278, %p279
      %p281 = scmp.ne.s32.totalorder %s270, %s273
      %p282 = scmp.eq.s32.totalorder %s25, 1
      %p283 = por %p281, %p282
      %p284 = scmp.ne.s32.totalorder %s273, %s274
      %p285 = scmp.eq.s32.totalorder %s25, 0
      %p286 = por %p284, %p285
      %p287 = scmp.ne.s32.totalorder %s273, %s274
      %p288 = scmp.eq.s32.totalorder %s26, 1
      %p289 = por %p287, %p288
      %p291 = scmp.ne.s32.totalorder %s274, %s290
      %p292 = scmp.eq.s32.totalorder %s26, 0
      %p293 = por %p291, %p292
      %p294 = scmp.le.s32.totalorder 1, %s20
      %p295 = scmp.lt.s32.totalorder %s20, 3
      %p296 = pnand %p294, %p295
      %p297 = pneg %p296
      // Predicated region
      $region9: #{rel_pos_mha_forward.2} parent=5 // pred_check
        _
      $region10: #{rel_pos_mha_forward.2} parent=5 // pred_check_branch
        %299 = sbr.rel (%p296) target = $region12
      $region11: #{rel_pos_mha_forward.2} parent=5 // pred_region
        %s300 = ssub.s32 %s20, 1
        // Predicated region
        $region13: #{rel_pos_mha_forward.2} parent=11 // pred_check
          %p301 = pneg %p119
        $region14: #{rel_pos_mha_forward.2} parent=11 // pred_check_branch
          %303 = sbr.rel (%p301) target = $region16
        $region15: #{rel_pos_mha_forward.2} parent=11 // pred_region
          _
        $region16: #{rel_pos_mha_forward.2} parent=11 // pred_fallthru
          _
        // Predicated region
        $region17: #{rel_pos_mha_forward.2} parent=11 // pred_check
          %p304 = pneg %p140
        $region18: #{rel_pos_mha_forward.2} parent=11 // pred_check_branch
          %306 = sbr.rel (%p304) target = $region20
        $region19: #{rel_pos_mha_forward.2} parent=11 // pred_region
          _
        $region20: #{rel_pos_mha_forward.2} parent=11 // pred_fallthru
          _
        // Predicated region
        $region21: #{rel_pos_mha_forward.2} parent=11 // pred_check
          %p307 = pneg %p161
        $region22: #{rel_pos_mha_forward.2} parent=11 // pred_check_branch
          %309 = sbr.rel (%p307) target = $region24
        $region23: #{rel_pos_mha_forward.2} parent=11 // pred_region
          _
        $region24: #{rel_pos_mha_forward.2} parent=11 // pred_fallthru
          _
        // Predicated region
        $region25: #{rel_pos_mha_forward.2} parent=11 // pred_check
          %p310 = pneg %p182
        $region26: #{rel_pos_mha_forward.2} parent=11 // pred_check_branch
          %312 = sbr.rel (%p310) target = $region28
        $region27: #{rel_pos_mha_forward.2} parent=11 // pred_region
          _
        $region28: #{rel_pos_mha_forward.2} parent=11 // pred_fallthru
          _
      $region12: #{rel_pos_mha_forward.2} parent=5 // pred_fallthru
        _
      %p313 = scmp.lt.s32.totalorder %s20, 2
      // Predicated region
      $region29: #{rel_pos_mha_forward.2} parent=5 // pred_check
        %p314 = pneg %p313
      $region30: #{rel_pos_mha_forward.2} parent=5 // pred_check_branch
        %316 = sbr.rel (%p314) target = $region32
      $region31: #{rel_pos_mha_forward.2} parent=5 // pred_region
        // Predicated region
        $region33: #{rel_pos_mha_forward.2} parent=31 // pred_check
          %p317 = pneg %p40
        $region34: #{rel_pos_mha_forward.2} parent=31 // pred_check_branch
          %319 = sbr.rel (%p317) target = $region36
        $region35: #{rel_pos_mha_forward.2} parent=31 // pred_region
          %p320 = scmp.lt.s32.totalorder %s20, 1
          %s321 = scalar_select %p320, %s20, 1
          %s322 = smul.addr %s321, 8
          %s323 = scalar_lea.vmem %s0, %s322
        $region36: #{rel_pos_mha_forward.2} parent=31 // pred_fallthru
          _
        // Predicated region
        $region37: #{rel_pos_mha_forward.2} parent=31 // pred_check
          %p324 = pneg %p66
        $region38: #{rel_pos_mha_forward.2} parent=31 // pred_check_branch
          %326 = sbr.rel (%p324) target = $region40
        $region39: #{rel_pos_mha_forward.2} parent=31 // pred_region
          %p327 = scmp.lt.s32.totalorder %s20, 1
          %s328 = scalar_select %p327, %s20, 1
          %s329 = smul.addr %s328, 8
          %s330 = scalar_lea.vmem %s1, %s329
        $region40: #{rel_pos_mha_forward.2} parent=31 // pred_fallthru
          _
        // Predicated region
        $region41: #{rel_pos_mha_forward.2} parent=31 // pred_check
          %p331 = pneg %p92
        $region42: #{rel_pos_mha_forward.2} parent=31 // pred_check_branch
          %333 = sbr.rel (%p331) target = $region44
        $region43: #{rel_pos_mha_forward.2} parent=31 // pred_region
          %p334 = scmp.lt.s32.totalorder %s20, 1
          %s335 = scalar_select %p334, %s20, 1
          %s336 = smul.addr %s335, 8
          %s337 = scalar_lea.vmem %s2, %s336
        $region44: #{rel_pos_mha_forward.2} parent=31 // pred_fallthru
          _
      $region32: #{rel_pos_mha_forward.2} parent=5 // pred_fallthru
        _
      %p338 = scmp.le.s32.totalorder 1, %s20
      %p339 = scmp.lt.s32.totalorder %s20, 3
      %p340 = pnand %p338, %p339
      %p341 = pneg %p340
      // Predicated region
      $region45: #{rel_pos_mha_forward.2} parent=5 // pred_check
        _
      $region46: #{rel_pos_mha_forward.2} parent=5 // pred_check_branch
        %343 = sbr.rel (%p340) target = $region48
      $region47: #{rel_pos_mha_forward.2} parent=5 // pred_region
        %s344 = ssub.s32 %s20, 1
        %p345 = scmp.lt.s32.totalorder %s25, 1
        %s346 = scalar_select %p345, %s25, 1
        %s347 = smul.addr %s346, 8
        %s348 = scalar_lea.vmem %s0, %s347
        %p349 = pneg %p46
        %p350 = pneg %p43
        %p351 = scmp.lt.s32.totalorder %s25, 1
        %s352 = scalar_select %p351, %s25, 1
        %s353 = smul.addr %s352, 8
        %s354 = scalar_lea.vmem %s1, %s353
        %p355 = pneg %p72
        %p356 = pneg %p69
        %p357 = scmp.lt.s32.totalorder %s25, 1
        %s358 = scalar_select %p357, %s25, 1
        %s359 = smul.addr %s358, 8
        %s360 = scalar_lea.vmem %s2, %s359
        %p361 = pneg %p98
        %p362 = pneg %p95
        %p363 = pneg %p119
        %p364 = pneg %p116
        %p365 = pneg %p140
        %p366 = pneg %p137
        %p367 = pneg %p161
        %p368 = pneg %p158
        %p369 = pneg %p182
        %p370 = pneg %p179
        %p371 = pneg %p208
        %p372 = pneg %p205
        %p373 = scmp.lt.s32.totalorder %s25, 1
        %s374 = scalar_select %p373, %s25, 1
        %s375 = smul.addr %s374, 4
        %s376 = scalar_lea.vmem %s7, %s375
        %p377 = pneg %p234
        %p378 = pneg %p231
        %p379 = scmp.lt.s32.totalorder %s25, 1
        %s380 = scalar_select %p379, %s25, 1
        %s381 = smul.addr %s380, 4
        %s382 = scalar_lea.vmem %s8, %s381
        %p383 = pneg %p260
        %p384 = pneg %p257
        %p385 = scmp.lt.s32.totalorder %s25, 1
        %s386 = scalar_select %p385, %s25, 1
        %s387 = smul.addr %s386, 4
        %s388 = scalar_lea.vmem %s9, %s387
        %p389 = pneg %p286
        %p390 = pneg %p283
        %s391 = sand.u32 %s273, 1
        %s392 = scalar_lea.sflag [#allocation3], %s391
        %s393 = sand.u32 %s273, 1
        %s394 = smul.addr %s393, 32
        %s395 = scalar_lea.vmem [#allocation2], %s394
        %p396 = scmp.lt.s32.totalorder %s25, 1
        %s397 = scalar_select %p396, %s25, 1
        %s398 = smul.addr %s397, 8
        %s399 = scalar_lea.vmem %s0, %s398
        %p400 = scmp.lt.s32.totalorder %s25, 1
        %s401 = scalar_select %p400, %s25, 1
        %s402 = smul.addr %s401, 8
        %s403 = scalar_lea.vmem %s1, %s402
        %p404 = scmp.lt.s32.totalorder %s25, 1
        %s405 = scalar_select %p404, %s25, 1
        %s406 = smul.addr %s405, 8
        %s407 = scalar_lea.vmem %s2, %s406
        %p408 = scmp.lt.s32.totalorder %s25, 1
        %s409 = scalar_select %p408, %s25, 1
        %s410 = smul.addr %s409, 4
        %s411 = scalar_lea.vmem %s7, %s410
        %p412 = scmp.lt.s32.totalorder %s25, 1
        %s413 = scalar_select %p412, %s25, 1
        %s414 = smul.addr %s413, 4
        %s415 = scalar_lea.vmem %s8, %s414
        %p416 = scmp.lt.s32.totalorder %s25, 1
        %s417 = scalar_select %p416, %s25, 1
        %s418 = smul.addr %s417, 4
        %s419 = scalar_lea.vmem %s9, %s418
        %v421 = vld [vmem:[%s6] sm:$0x7]
        %v422 = vld [vmem:[%s399] sm:$0xff]
        %v423 = vpack.c.bf16 %v422, %v422
        %v424 = vld [vmem:[%s403] sm:$0xff]
        %v425 = vpack.c.bf16 %v424, %v424
        %v426 = vld [vmem:[%s407] sm:$0xff]
        %v427 = vpack.c.bf16 %v426, %v426
        %v428 = vld [vmem:[%s3] sm:$0xf]
        %v429 = vld [vmem:[%s3 + $0x4] sm:$0xf]
        %v430 = vld [vmem:[%s3 + $0x8] sm:$0xf]
        %v431 = vld [vmem:[%s3 + $0xc] sm:$0xf]
        %v432 = vlaneseq
        %v433 = vshrl.u32 %v432, 7
        %v434 = vsub.s32 0, %v433
        %v435 = vrot.slane %v421, %v434
        %v440 = vunpack.c.l.b16 %v428
        %v441 = vunpack.c.l.b16 %v429
        %v442 = vunpack.c.l.b16 %v430
        %v443 = vunpack.c.l.b16 %v431
        %v444 = vpack.c.b16 %v441, %v440
        %v445 = vpack.c.b16 %v443, %v442
        %vm448 = vcmask 261120
        %v450 = vsel %vm448, %v423, 0
        %452 = vmatprep.subr.bf16.mxu0 0
        %453 = vmatpush1.bf16.msra.mxu0 %v444
        %454 = vmatprep.subr.bf16.mxu0 0
        %455 = vmatpush1.bf16.msra.mxu0 %v445
        %456 = vmatprep.subr.bf16.mxu0 0
        %457 = vmatpush1.bf16.msra.mxu0 0
        %458 = vmatprep.subr.bf16.mxu0 0
        %459 = vmatpush1.bf16.msra.mxu0 0
        %460 = vmatprep.subr.bf16.mxu0 0
        %461 = vmatpush1.bf16.msra.mxu0 0
        %462 = vmatprep.subr.bf16.mxu0 0
        %463 = vmatpush1.bf16.msra.mxu0 0
        %464 = vmatprep.subr.bf16.mxu0 0
        %465 = vmatpush1.bf16.msra.mxu0 0
        %466 = vmatprep.subr.bf16.mxu0 0
        %467 = vmatpush1.bf16.msra.mxu0 0
        %468 = vmatprep.subr.bf16.mxu0 0
        %469 = vmatpush1.bf16.msra.mxu0 0
        %470 = vmatprep.subr.bf16.mxu0 0
        %471 = vmatpush1.bf16.msra.mxu0 0
        %472 = vmatprep.subr.bf16.mxu0 0
        %473 = vmatpush1.bf16.msra.mxu0 0
        %474 = vmatprep.subr.bf16.mxu0 0
        %475 = vmatpush1.bf16.msra.mxu0 0
        %476 = vmatprep.subr.bf16.mxu0 0
        %477 = vmatpush1.bf16.msra.mxu0 0
        %478 = vmatprep.subr.bf16.mxu0 0
        %479 = vmatpush1.bf16.msra.mxu0 0
        %480 = vmatprep.subr.bf16.mxu0 0
        %481 = vmatpush1.bf16.msra.mxu0 0
        %482 = vmatprep.subr.bf16.mxu0 0
        %483 = vmatpush1.bf16.msra.mxu0 0
        %484 = vmatprep.mubr.bf16.mxu0 0
        %485 = vmatmul.mubr.bf16.gmra.mrb[0].mxu0 %v450
        %v486 = vpop.f32.mrb[0].mxu0
        %v487 = vadd.f32 %v435, %v486
        %v488 = vpop.f32.mrb[0].mxu0
        %v489 = vpop.f32.mrb[0].mxu0
        %v490 = vpop.f32.mrb[0].mxu0
        %491 = vdwg.mxu0
        %v492 = vld [vmem:[%s4] sm:$0xf]
        %v493 = vld [vmem:[%s4 + $0x4] sm:$0xf]
        %v494 = vld [vmem:[%s4 + $0x8] sm:$0xf]
        %v495 = vld [vmem:[%s4 + $0xc] sm:$0xf]
        %v496 = vlaneseq
        %v497 = vshrl.u32 %v496, 7
        %v498 = vsub.s32 1, %v497
        %v499 = vrot.slane %v421, %v498
        %v504 = vunpack.c.l.b16 %v492
        %v505 = vunpack.c.l.b16 %v493
        %v506 = vunpack.c.l.b16 %v494
        %v507 = vunpack.c.l.b16 %v495
        %v508 = vpack.c.b16 %v505, %v504
        %v509 = vpack.c.b16 %v507, %v506
        %v513 = vsel %vm448, %v425, 0
        %515 = vmatprep.subr.bf16.mxu0 0
        %516 = vmatpush1.bf16.msra.mxu0 %v508
        %517 = vmatprep.subr.bf16.mxu0 0
        %518 = vmatpush1.bf16.msra.mxu0 %v509
        %519 = vmatprep.subr.bf16.mxu0 0
        %520 = vmatpush1.bf16.msra.mxu0 0
        %521 = vmatprep.subr.bf16.mxu0 0
        %522 = vmatpush1.bf16.msra.mxu0 0
        %523 = vmatprep.subr.bf16.mxu0 0
        %524 = vmatpush1.bf16.msra.mxu0 0
        %525 = vmatprep.subr.bf16.mxu0 0
        %526 = vmatpush1.bf16.msra.mxu0 0
        %527 = vmatprep.subr.bf16.mxu0 0
        %528 = vmatpush1.bf16.msra.mxu0 0
        %529 = vmatprep.subr.bf16.mxu0 0
        %530 = vmatpush1.bf16.msra.mxu0 0
        %531 = vmatprep.subr.bf16.mxu0 0
        %532 = vmatpush1.bf16.msra.mxu0 0
        %533 = vmatprep.subr.bf16.mxu0 0
        %534 = vmatpush1.bf16.msra.mxu0 0
        %535 = vmatprep.subr.bf16.mxu0 0
        %536 = vmatpush1.bf16.msra.mxu0 0
        %537 = vmatprep.subr.bf16.mxu0 0
        %538 = vmatpush1.bf16.msra.mxu0 0
        %539 = vmatprep.subr.bf16.mxu0 0
        %540 = vmatpush1.bf16.msra.mxu0 0
        %541 = vmatprep.subr.bf16.mxu0 0
        %542 = vmatpush1.bf16.msra.mxu0 0
        %543 = vmatprep.subr.bf16.mxu0 0
        %544 = vmatpush1.bf16.msra.mxu0 0
        %545 = vmatprep.subr.bf16.mxu0 0
        %546 = vmatpush1.bf16.msra.mxu0 0
        %547 = vmatprep.mubr.bf16.mxu0 0
        %548 = vmatmul.mubr.bf16.gmra.mrb[0].mxu0 %v513
        %v549 = vpop.f32.mrb[0].mxu0
        %v550 = vadd.f32 %v499, %v549
        %v551 = vpop.f32.mrb[0].mxu0
        %v552 = vpop.f32.mrb[0].mxu0
        %v553 = vpop.f32.mrb[0].mxu0
        %554 = vdwg.mxu0
        %v555 = vld [vmem:[%s5] sm:$0xf]
        %v556 = vld [vmem:[%s5 + $0x4] sm:$0xf]
        %v557 = vld [vmem:[%s5 + $0x8] sm:$0xf]
        %v558 = vld [vmem:[%s5 + $0xc] sm:$0xf]
        %v559 = vlaneseq
        %v560 = vshrl.u32 %v559, 7
        %v561 = vsub.s32 2, %v560
        %v562 = vrot.slane %v421, %v561
        %v567 = vunpack.c.l.b16 %v555
        %v568 = vunpack.c.l.b16 %v556
        %v569 = vunpack.c.l.b16 %v557
        %v570 = vunpack.c.l.b16 %v558
        %v571 = vpack.c.b16 %v568, %v567
        %v572 = vpack.c.b16 %v570, %v569
        %v576 = vsel %vm448, %v427, 0
        %578 = vmatprep.subr.bf16.mxu0 0
        %579 = vmatpush1.bf16.msra.mxu0 %v571
        %580 = vmatprep.subr.bf16.mxu0 0
        %581 = vmatpush1.bf16.msra.mxu0 %v572
        %582 = vmatprep.subr.bf16.mxu0 0
        %583 = vmatpush1.bf16.msra.mxu0 0
        %584 = vmatprep.subr.bf16.mxu0 0
        %585 = vmatpush1.bf16.msra.mxu0 0
        %586 = vmatprep.subr.bf16.mxu0 0
        %587 = vmatpush1.bf16.msra.mxu0 0
        %588 = vmatprep.subr.bf16.mxu0 0
        %589 = vmatpush1.bf16.msra.mxu0 0
        %590 = vmatprep.subr.bf16.mxu0 0
        %591 = vmatpush1.bf16.msra.mxu0 0
        %592 = vmatprep.subr.bf16.mxu0 0
        %593 = vmatpush1.bf16.msra.mxu0 0
        %594 = vmatprep.subr.bf16.mxu0 0
        %595 = vmatpush1.bf16.msra.mxu0 0
        %596 = vmatprep.subr.bf16.mxu0 0
        %597 = vmatpush1.bf16.msra.mxu0 0
        %598 = vmatprep.subr.bf16.mxu0 0
        %599 = vmatpush1.bf16.msra.mxu0 0
        %600 = vmatprep.subr.bf16.mxu0 0
        %601 = vmatpush1.bf16.msra.mxu0 0
        %602 = vmatprep.subr.bf16.mxu0 0
        %603 = vmatpush1.bf16.msra.mxu0 0
        %604 = vmatprep.subr.bf16.mxu0 0
        %605 = vmatpush1.bf16.msra.mxu0 0
        %606 = vmatprep.subr.bf16.mxu0 0
        %607 = vmatpush1.bf16.msra.mxu0 0
        %608 = vmatprep.subr.bf16.mxu0 0
        %609 = vmatpush1.bf16.msra.mxu0 0
        %610 = vmatprep.mubr.bf16.mxu0 0
        %611 = vmatmul.mubr.bf16.gmra.mrb[0].mxu0 %v576
        %v612 = vpop.f32.mrb[0].mxu0
        %v613 = vadd.f32 %v562, %v612
        %v614 = vpop.f32.mrb[0].mxu0
        %v615 = vpop.f32.mrb[0].mxu0
        %v616 = vpop.f32.mrb[0].mxu0
        %617 = vdwg.mxu0
        %v618 = vpack.c.bf16 %v487, %v487
        %vm619 = vcmask 257024
        %620 = vst.msk [vmem:[%s411] sm:$0xf] %vm619, %v618
        %v621 = vpack.c.bf16 %v550, %v550
        %622 = vst.msk [vmem:[%s415] sm:$0xf] %vm619, %v621
        %v623 = vpack.c.bf16 %v613, %v613
        %624 = vst.msk [vmem:[%s419] sm:$0xf] %vm619, %v623
        %vm625 = vcmask 64512
        %626 = vst.msk [vmem:[%s395] sm:$0xff] %vm625, %v550
        %628 = vrot.lane.b32.xlu0 %v613, 8
        %v629 = vpop.permute.xlu0 %628
        %vm631 = vcmask 130112
        %632 = vst.msk [vmem:[%s395] sm:$0xff] %vm631, %v629
        %634 = vrot.lane.b32.xlu0 %v550, 120
        %v635 = vpop.permute.xlu0 %634
        %s637 = scalar_lea.vmem %s395, 8 [#allocation2]
        %638 = vst.msk [vmem:[%s637] sm:$0xff] %vm625, %v635
        %639 = vst.msk [vmem:[%s637] sm:$0xff] %vm631, %v613
        %640 = vrot.lane.b32.xlu0 %v550, 112
        %v641 = vpop.permute.xlu0 %640
        %s643 = scalar_lea.vmem %s395, 16 [#allocation2]
        %644 = vst.msk [vmem:[%s643] sm:$0xff] %vm625, %v641
        %645 = vrot.lane.b32.xlu0 %v613, 120
        %v646 = vpop.permute.xlu0 %645
        %648 = vst.msk [vmem:[%s643] sm:$0xff] %vm631, %v646
        %649 = vrot.lane.b32.xlu0 %v550, 104
        %v650 = vpop.permute.xlu0 %649
        %s652 = scalar_lea.vmem %s395, 24 [#allocation2]
        %653 = vst.msk [vmem:[%s652] sm:$0xff] %vm625, %v650
        %654 = vrot.lane.b32.xlu0 %v613, 112
        %v655 = vpop.permute.xlu0 %654
        %657 = vst.msk [vmem:[%s652] sm:$0xff] %vm631, %v655
        %p658 = scmp.lt.s32.totalorder %s25, 1
        %s659 = scalar_select %p658, %s25, 1
        %s660 = smul.addr %s659, 4
        %s661 = scalar_lea.vmem %s7, %s660
        %p662 = scmp.lt.s32.totalorder %s25, 1
        %s663 = scalar_select %p662, %s25, 1
        %s664 = smul.addr %s663, 4
        %s665 = scalar_lea.vmem %s8, %s664
        %p666 = scmp.lt.s32.totalorder %s25, 1
        %s667 = scalar_select %p666, %s25, 1
        %s668 = smul.addr %s667, 4
        %s669 = scalar_lea.vmem %s9, %s668
        %s670 = sand.u32 %s273, 1
        %s671 = scalar_lea.sflag [#allocation3], %s670
        %s672 = sand.u32 %s273, 1
        %s673 = smul.addr %s672, 32
        %s674 = scalar_lea.vmem [#allocation2], %s673
        // Predicated region
        $region49: #{rel_pos_mha_forward.2} parent=47 // pred_check
          %p675 = pneg %p205
        $region50: #{rel_pos_mha_forward.2} parent=47 // pred_check_branch
          %677 = sbr.rel (%p675) target = $region52
        $region51: #{rel_pos_mha_forward.2} parent=47 // pred_region
          _
        $region52: #{rel_pos_mha_forward.2} parent=47 // pred_fallthru
          _
        // Predicated region
        $region53: #{rel_pos_mha_forward.2} parent=47 // pred_check
          %p678 = pneg %p231
        $region54: #{rel_pos_mha_forward.2} parent=47 // pred_check_branch
          %680 = sbr.rel (%p678) target = $region56
        $region55: #{rel_pos_mha_forward.2} parent=47 // pred_region
          _
        $region56: #{rel_pos_mha_forward.2} parent=47 // pred_fallthru
          _
        // Predicated region
        $region57: #{rel_pos_mha_forward.2} parent=47 // pred_check
          %p681 = pneg %p257
        $region58: #{rel_pos_mha_forward.2} parent=47 // pred_check_branch
          %683 = sbr.rel (%p681) target = $region60
        $region59: #{rel_pos_mha_forward.2} parent=47 // pred_region
          _
        $region60: #{rel_pos_mha_forward.2} parent=47 // pred_fallthru
          _
        // Predicated region
        $region61: #{rel_pos_mha_forward.2} parent=47 // pred_check
          %p684 = pneg %p283
        $region62: #{rel_pos_mha_forward.2} parent=47 // pred_check_branch
          %686 = sbr.rel (%p684) target = $region64
        $region63: #{rel_pos_mha_forward.2} parent=47 // pred_region
          %s688 = ssub.s32 512, 512
          %689 = vsyncadd %s671, %s688
          %s690 = smul.addr %s25, 4
          %s691 = smul.addr %s690, 128
          %s692 = scalar_lea.hbm %s10, %s691
          %s693 = sshll.u32 %s674, 4
          %s694 = int_to_ptr.vmem [resolvable:$true] %s693
          %699 = dma.vmem_to_hbm [thread:$0]  %s694, 512, %s692, %s671, 128, 128, 8
        $region64: #{rel_pos_mha_forward.2} parent=47 // pred_fallthru
          _
      $region48: #{rel_pos_mha_forward.2} parent=5 // pred_fallthru
        _
      %p700 = scmp.le.s32.totalorder 2, %s20
      // Predicated region
      $region65: #{rel_pos_mha_forward.2} parent=5 // pred_check
        %p701 = pneg %p700
      $region66: #{rel_pos_mha_forward.2} parent=5 // pred_check_branch
        %703 = sbr.rel (%p701) target = $region68
      $region67: #{rel_pos_mha_forward.2} parent=5 // pred_region
        %s704 = ssub.s32 %s20, 2
        // Predicated region
        $region69: #{rel_pos_mha_forward.2} parent=67 // pred_check
          %p705 = pneg %p211
        $region70: #{rel_pos_mha_forward.2} parent=67 // pred_check_branch
          %707 = sbr.rel (%p705) target = $region72
        $region71: #{rel_pos_mha_forward.2} parent=67 // pred_region
          %p708 = scmp.lt.s32.totalorder %s26, 1
          %s709 = scalar_select %p708, %s26, 1
          %s710 = smul.addr %s709, 4
          %s711 = scalar_lea.vmem %s7, %s710
        $region72: #{rel_pos_mha_forward.2} parent=67 // pred_fallthru
          _
        // Predicated region
        $region73: #{rel_pos_mha_forward.2} parent=67 // pred_check
          %p712 = pneg %p237
        $region74: #{rel_pos_mha_forward.2} parent=67 // pred_check_branch
          %714 = sbr.rel (%p712) target = $region76
        $region75: #{rel_pos_mha_forward.2} parent=67 // pred_region
          %p715 = scmp.lt.s32.totalorder %s26, 1
          %s716 = scalar_select %p715, %s26, 1
          %s717 = smul.addr %s716, 4
          %s718 = scalar_lea.vmem %s8, %s717
        $region76: #{rel_pos_mha_forward.2} parent=67 // pred_fallthru
          _
        // Predicated region
        $region77: #{rel_pos_mha_forward.2} parent=67 // pred_check
          %p719 = pneg %p263
        $region78: #{rel_pos_mha_forward.2} parent=67 // pred_check_branch
          %721 = sbr.rel (%p719) target = $region80
        $region79: #{rel_pos_mha_forward.2} parent=67 // pred_region
          %p722 = scmp.lt.s32.totalorder %s26, 1
          %s723 = scalar_select %p722, %s26, 1
          %s724 = smul.addr %s723, 4
          %s725 = scalar_lea.vmem %s9, %s724
        $region80: #{rel_pos_mha_forward.2} parent=67 // pred_fallthru
          _
        // Predicated region
        $region81: #{rel_pos_mha_forward.2} parent=67 // pred_check
          %p726 = pneg %p289
        $region82: #{rel_pos_mha_forward.2} parent=67 // pred_check_branch
          %728 = sbr.rel (%p726) target = $region84
        $region83: #{rel_pos_mha_forward.2} parent=67 // pred_region
          %s729 = sand.u32 %s274, 1
          %s730 = scalar_lea.sflag [#allocation3], %s729
          %s731 = sand.u32 %s274, 1
          %s732 = smul.addr %s731, 32
          %s733 = scalar_lea.vmem [#allocation2], %s732
          %734 = dma.done %s730, 512
        $region84: #{rel_pos_mha_forward.2} parent=67 // pred_fallthru
          _
      $region68: #{rel_pos_mha_forward.2} parent=5 // pred_fallthru
        _
    $region6: #{rel_pos_mha_forward.2} parent=1 // loop_footer
      %s24 = sadd.s32 1, %s20
    $region7: #{rel_pos_mha_forward.2} parent=1 // loop_footer_branch
      %19 = sbr.rel target = $region3
    $region8: #{rel_pos_mha_forward.2} parent=1 // loop_exit
      _
    %735 = vsyncpa [#allocation3], 1
    %s736 = scalar_lea.sflag [#allocation3], 1
    %737 = vsyncpa %s736, 1

// kernel: rel_pos_mha_forward.3
$region0: #{rel_pos_mha_forward.3}
  #allocation0 [shape = 'u32[]', space=smem, size = 0x4, offset = 0x4, fixed_abs, tag = 'smem constant byte address 0x4 - core index']
  #allocation1 [shape = 'u32[144,128]{1,0:T(1,128)}', space=vmem, size = 0x12000, scoped, tag = 'internal scratch']
  #allocation2 [shape = 'f32[8,32]{1,0:T(8,128)}', space=vmem, size = 0x1000, scoped, tag = 'scratch operand']
  %s0 = inlined_call_operand.vmem [shape: bf16[2,8,32], index: 0, kind: input, shape index: {}]
  %s1 = inlined_call_operand.vmem [shape: bf16[2,8,32], index: 1, kind: input, shape index: {}]
  %s2 = inlined_call_operand.vmem [shape: bf16[2,8,32], index: 2, kind: input, shape index: {}]
  %s3 = inlined_call_operand.vmem [shape: bf16[8,32], index: 3, kind: input, shape index: {}]
  %s4 = inlined_call_operand.vmem [shape: bf16[4,32], index: 4, kind: input, shape index: {}]
  %s5 = inlined_call_operand.vmem [shape: f32[4,8], index: 5, kind: input, shape index: {}]
  %s6 = inlined_call_operand.vmem [shape: f32[2,1,8], index: 6, kind: input, shape index: {}]
  %s7 = inlined_call_operand.vmem [shape: bf16[32,32], index: 7, kind: input, shape index: {}]
  %s8 = inlined_call_operand.vmem [shape: f32[1,32], index: 8, kind: input, shape index: {}]
  %s9 = inlined_call_operand.hbm [shape: f32[2,8,32], index: 9, kind: output, shape index: {}]
  %s10 = sld [smem:[#allocation0]]
  $region69: #{rel_pos_mha_forward.3} parent=0
    _
  %s12 = ssub.s32 1, %s10
  %s13 = scalar_select 0, %s12, %s10
  $region1: #{rel_pos_mha_forward.3} parent=0
    #allocation3 [shape = 'u8[8192]{0}', space=vmem, size = 0x2000, scoped, tag = 'output window, operand 0']
    #allocation4 [shape = 's32[2]{0}', space=sflag, size = 0x8, scoped, tag = 'scoped memory for rel_pos_mha_forward.3']
    %14 = vsyncpa [#allocation4], 0
    %s15 = scalar_lea.sflag [#allocation4], 1
    %16 = vsyncpa %s15, 0
    loop: start=0, step=1, limit=4
    $region2: #{rel_pos_mha_forward.3} parent=1 // loop_pre_header
      _
    $region3: #{rel_pos_mha_forward.3} parent=1 // loop_header
      %s18 = sphi 0, %s22
      %p19 = scmp.ge.s32.totalorder %s18, 4
      %s25 = sphi 0, %s37
      %s26 = sphi 0, %s33
      %s27 = sphi 0, %s25
      %s28 = sphi 0, %s26
      %s29 = sphi 0, %s27
      %s30 = sphi 0, %s28
      %s42 = sphi 0, %s44
      %s45 = sphi 0, %s42
      %s46 = sphi 0, %s45
      %s62 = sphi 0, %s46
      %s68 = sphi 0, %s70
      %s71 = sphi 0, %s68
      %s72 = sphi 0, %s71
      %s88 = sphi 0, %s72
      %s94 = sphi 0, %s96
      %s97 = sphi 0, %s94
      %s98 = sphi 0, %s97
      %s114 = sphi 0, %s98
      %s118 = sphi 0, %s118
      %s120 = sphi 0, %s118
      %s121 = sphi 0, %s120
      %s135 = sphi 0, %s121
      %s139 = sphi 0, %s139
      %s141 = sphi 0, %s139
      %s142 = sphi 0, %s141
      %s156 = sphi 0, %s142
      %s160 = sphi 0, %s160
      %s162 = sphi 0, %s160
      %s163 = sphi 0, %s162
      %s177 = sphi 0, %s163
      %s183 = sphi 0, %s185
      %s186 = sphi 0, %s183
      %s187 = sphi 0, %s186
      %s203 = sphi 0, %s187
      %s207 = sphi 0, %s207
      %s209 = sphi 0, %s207
      %s210 = sphi 0, %s209
      %s224 = sphi 0, %s210
      %s228 = sphi 0, %s228
      %s230 = sphi 0, %s228
      %s231 = sphi 0, %s230
      %s245 = sphi 0, %s231
      %s253 = sphi 0, %s255
      %s256 = sphi 0, %s253
      %s257 = sphi 0, %s256
      %s273 = sphi 0, %s257
    $region4: #{rel_pos_mha_forward.3} parent=1 // loop_header_branch
      %21 = sbr.rel (%p19) target = $region8
    $region5: #{rel_pos_mha_forward.3} parent=1 // loop_body
      %s23 = ssub.s32 %s18, 1
      %s24 = ssub.s32 %s18, 2
      %s31 = sadd.s32 1, %s26
      %p32 = scmp.ge.s32.totalorder %s31, 1
      %s33 = scalar_select %p32, 0, %s31
      %s34 = sadd.s32 1, %s25
      %s35 = scalar_select %p32, %s34, %s25
      %p36 = scmp.ge.s32.totalorder %s35, 2
      %s37 = scalar_select %p36, 0, %s35
      %s38 = ssub.s32 %s25, %s37
      %s39 = ssub.s32 %s26, %s33
      %s40 = sor.u32 %s38, %s39
      %p41 = scmp.eq.s32.totalorder %s40, 0
      %s43 = sadd.s32 %s42, 1
      %s44 = scalar_select %p41, %s42, %s43
      %p47 = pneg %p41
      %p48 = scmp.eq.s32.totalorder %s18, 1
      %p49 = por %p47, %p48
      %p50 = scmp.ne.s32.totalorder %s42, %s45
      %p51 = scmp.eq.s32.totalorder %s18, 0
      %p52 = por %p50, %p51
      %p53 = scmp.ne.s32.totalorder %s42, %s45
      %p54 = scmp.eq.s32.totalorder %s23, 1
      %p55 = por %p53, %p54
      %p56 = scmp.ne.s32.totalorder %s45, %s46
      %p57 = scmp.eq.s32.totalorder %s23, 0
      %p58 = por %p56, %p57
      %p59 = scmp.ne.s32.totalorder %s45, %s46
      %p60 = scmp.eq.s32.totalorder %s24, 1
      %p61 = por %p59, %p60
      %p63 = scmp.ne.s32.totalorder %s46, %s62
      %p64 = scmp.eq.s32.totalorder %s24, 0
      %p65 = por %p63, %p64
      %s66 = ssub.s32 %s25, %s37
      %p67 = scmp.eq.s32.totalorder %s66, 0
      %s69 = sadd.s32 %s68, 1
      %s70 = scalar_select %p67, %s68, %s69
      %p73 = pneg %p67
      %p74 = scmp.eq.s32.totalorder %s18, 1
      %p75 = por %p73, %p74
      %p76 = scmp.ne.s32.totalorder %s68, %s71
      %p77 = scmp.eq.s32.totalorder %s18, 0
      %p78 = por %p76, %p77
      %p79 = scmp.ne.s32.totalorder %s68, %s71
      %p80 = scmp.eq.s32.totalorder %s23, 1
      %p81 = por %p79, %p80
      %p82 = scmp.ne.s32.totalorder %s71, %s72
      %p83 = scmp.eq.s32.totalorder %s23, 0
      %p84 = por %p82, %p83
      %p85 = scmp.ne.s32.totalorder %s71, %s72
      %p86 = scmp.eq.s32.totalorder %s24, 1
      %p87 = por %p85, %p86
      %p89 = scmp.ne.s32.totalorder %s72, %s88
      %p90 = scmp.eq.s32.totalorder %s24, 0
      %p91 = por %p89, %p90
      %s92 = ssub.s32 %s25, %s37
      %p93 = scmp.eq.s32.totalorder %s92, 0
      %s95 = sadd.s32 %s94, 1
      %s96 = scalar_select %p93, %s94, %s95
      %p99 = pneg %p93
      %p100 = scmp.eq.s32.totalorder %s18, 1
      %p101 = por %p99, %p100
      %p102 = scmp.ne.s32.totalorder %s94, %s97
      %p103 = scmp.eq.s32.totalorder %s18, 0
      %p104 = por %p102, %p103
      %p105 = scmp.ne.s32.totalorder %s94, %s97
      %p106 = scmp.eq.s32.totalorder %s23, 1
      %p107 = por %p105, %p106
      %p108 = scmp.ne.s32.totalorder %s97, %s98
      %p109 = scmp.eq.s32.totalorder %s23, 0
      %p110 = por %p108, %p109
      %p111 = scmp.ne.s32.totalorder %s97, %s98
      %p112 = scmp.eq.s32.totalorder %s24, 1
      %p113 = por %p111, %p112
      %p115 = scmp.ne.s32.totalorder %s98, %s114
      %p116 = scmp.eq.s32.totalorder %s24, 0
      %p117 = por %p115, %p116
      %s119 = sadd.s32 %s118, 1
      %p122 = scmp.eq.s32.totalorder %s18, 1
      %p123 = scmp.ne.s32.totalorder %s118, %s120
      %p124 = scmp.eq.s32.totalorder %s18, 0
      %p125 = por %p123, %p124
      %p126 = scmp.ne.s32.totalorder %s118, %s120
      %p127 = scmp.eq.s32.totalorder %s23, 1
      %p128 = por %p126, %p127
      %p129 = scmp.ne.s32.totalorder %s120, %s121
      %p130 = scmp.eq.s32.totalorder %s23, 0
      %p131 = por %p129, %p130
      %p132 = scmp.ne.s32.totalorder %s120, %s121
      %p133 = scmp.eq.s32.totalorder %s24, 1
      %p134 = por %p132, %p133
      %p136 = scmp.ne.s32.totalorder %s121, %s135
      %p137 = scmp.eq.s32.totalorder %s24, 0
      %p138 = por %p136, %p137
      %s140 = sadd.s32 %s139, 1
      %p143 = scmp.eq.s32.totalorder %s18, 1
      %p144 = scmp.ne.s32.totalorder %s139, %s141
      %p145 = scmp.eq.s32.totalorder %s18, 0
      %p146 = por %p144, %p145
      %p147 = scmp.ne.s32.totalorder %s139, %s141
      %p148 = scmp.eq.s32.totalorder %s23, 1
      %p149 = por %p147, %p148
      %p150 = scmp.ne.s32.totalorder %s141, %s142
      %p151 = scmp.eq.s32.totalorder %s23, 0
      %p152 = por %p150, %p151
      %p153 = scmp.ne.s32.totalorder %s141, %s142
      %p154 = scmp.eq.s32.totalorder %s24, 1
      %p155 = por %p153, %p154
      %p157 = scmp.ne.s32.totalorder %s142, %s156
      %p158 = scmp.eq.s32.totalorder %s24, 0
      %p159 = por %p157, %p158
      %s161 = sadd.s32 %s160, 1
      %p164 = scmp.eq.s32.totalorder %s18, 1
      %p165 = scmp.ne.s32.totalorder %s160, %s162
      %p166 = scmp.eq.s32.totalorder %s18, 0
      %p167 = por %p165, %p166
      %p168 = scmp.ne.s32.totalorder %s160, %s162
      %p169 = scmp.eq.s32.totalorder %s23, 1
      %p170 = por %p168, %p169
      %p171 = scmp.ne.s32.totalorder %s162, %s163
      %p172 = scmp.eq.s32.totalorder %s23, 0
      %p173 = por %p171, %p172
      %p174 = scmp.ne.s32.totalorder %s162, %s163
      %p175 = scmp.eq.s32.totalorder %s24, 1
      %p176 = por %p174, %p175
      %p178 = scmp.ne.s32.totalorder %s163, %s177
      %p179 = scmp.eq.s32.totalorder %s24, 0
      %p180 = por %p178, %p179
      %s181 = ssub.s32 %s25, %s37
      %p182 = scmp.eq.s32.totalorder %s181, 0
      %s184 = sadd.s32 %s183, 1
      %s185 = scalar_select %p182, %s183, %s184
      %p188 = pneg %p182
      %p189 = scmp.eq.s32.totalorder %s18, 1
      %p190 = por %p188, %p189
      %p191 = scmp.ne.s32.totalorder %s183, %s186
      %p192 = scmp.eq.s32.totalorder %s18, 0
      %p193 = por %p191, %p192
      %p194 = scmp.ne.s32.totalorder %s183, %s186
      %p195 = scmp.eq.s32.totalorder %s23, 1
      %p196 = por %p194, %p195
      %p197 = scmp.ne.s32.totalorder %s186, %s187
      %p198 = scmp.eq.s32.totalorder %s23, 0
      %p199 = por %p197, %p198
      %p200 = scmp.ne.s32.totalorder %s186, %s187
      %p201 = scmp.eq.s32.totalorder %s24, 1
      %p202 = por %p200, %p201
      %p204 = scmp.ne.s32.totalorder %s187, %s203
      %p205 = scmp.eq.s32.totalorder %s24, 0
      %p206 = por %p204, %p205
      %s208 = sadd.s32 %s207, 1
      %p211 = scmp.eq.s32.totalorder %s18, 1
      %p212 = scmp.ne.s32.totalorder %s207, %s209
      %p213 = scmp.eq.s32.totalorder %s18, 0
      %p214 = por %p212, %p213
      %p215 = scmp.ne.s32.totalorder %s207, %s209
      %p216 = scmp.eq.s32.totalorder %s23, 1
      %p217 = por %p215, %p216
      %p218 = scmp.ne.s32.totalorder %s209, %s210
      %p219 = scmp.eq.s32.totalorder %s23, 0
      %p220 = por %p218, %p219
      %p221 = scmp.ne.s32.totalorder %s209, %s210
      %p222 = scmp.eq.s32.totalorder %s24, 1
      %p223 = por %p221, %p222
      %p225 = scmp.ne.s32.totalorder %s210, %s224
      %p226 = scmp.eq.s32.totalorder %s24, 0
      %p227 = por %p225, %p226
      %s229 = sadd.s32 %s228, 1
      %p232 = scmp.eq.s32.totalorder %s18, 1
      %p233 = scmp.ne.s32.totalorder %s228, %s230
      %p234 = scmp.eq.s32.totalorder %s18, 0
      %p235 = por %p233, %p234
      %p236 = scmp.ne.s32.totalorder %s228, %s230
      %p237 = scmp.eq.s32.totalorder %s23, 1
      %p238 = por %p236, %p237
      %p239 = scmp.ne.s32.totalorder %s230, %s231
      %p240 = scmp.eq.s32.totalorder %s23, 0
      %p241 = por %p239, %p240
      %p242 = scmp.ne.s32.totalorder %s230, %s231
      %p243 = scmp.eq.s32.totalorder %s24, 1
      %p244 = por %p242, %p243
      %p246 = scmp.ne.s32.totalorder %s231, %s245
      %p247 = scmp.eq.s32.totalorder %s24, 0
      %p248 = por %p246, %p247
      %s249 = ssub.s32 %s25, %s37
      %s250 = ssub.s32 %s26, %s33
      %s251 = sor.u32 %s249, %s250
      %p252 = scmp.eq.s32.totalorder %s251, 0
      %s254 = sadd.s32 %s253, 1
      %s255 = scalar_select %p252, %s253, %s254
      %p258 = pneg %p252
      %p259 = scmp.eq.s32.totalorder %s18, 1
      %p260 = por %p258, %p259
      %p261 = scmp.ne.s32.totalorder %s253, %s256
      %p262 = scmp.eq.s32.totalorder %s18, 0
      %p263 = por %p261, %p262
      %p264 = scmp.ne.s32.totalorder %s253, %s256
      %p265 = scmp.eq.s32.totalorder %s23, 1
      %p266 = por %p264, %p265
      %p267 = scmp.ne.s32.totalorder %s256, %s257
      %p268 = scmp.eq.s32.totalorder %s23, 0
      %p269 = por %p267, %p268
      %p270 = scmp.ne.s32.totalorder %s256, %s257
      %p271 = scmp.eq.s32.totalorder %s24, 1
      %p272 = por %p270, %p271
      %p274 = scmp.ne.s32.totalorder %s257, %s273
      %p275 = scmp.eq.s32.totalorder %s24, 0
      %p276 = por %p274, %p275
      %p277 = scmp.le.s32.totalorder 1, %s18
      %p278 = scmp.lt.s32.totalorder %s18, 3
      %p279 = pnand %p277, %p278
      %p280 = pneg %p279
      // Predicated region
      $region9: #{rel_pos_mha_forward.3} parent=5 // pred_check
        _
      $region10: #{rel_pos_mha_forward.3} parent=5 // pred_check_branch
        %282 = sbr.rel (%p279) target = $region12
      $region11: #{rel_pos_mha_forward.3} parent=5 // pred_region
        %s283 = ssub.s32 %s18, 1
        // Predicated region
        $region13: #{rel_pos_mha_forward.3} parent=11 // pred_check
          %p284 = pneg %p131
        $region14: #{rel_pos_mha_forward.3} parent=11 // pred_check_branch
          %286 = sbr.rel (%p284) target = $region16
        $region15: #{rel_pos_mha_forward.3} parent=11 // pred_region
          _
        $region16: #{rel_pos_mha_forward.3} parent=11 // pred_fallthru
          _
        // Predicated region
        $region17: #{rel_pos_mha_forward.3} parent=11 // pred_check
          %p287 = pneg %p152
        $region18: #{rel_pos_mha_forward.3} parent=11 // pred_check_branch
          %289 = sbr.rel (%p287) target = $region20
        $region19: #{rel_pos_mha_forward.3} parent=11 // pred_region
          _
        $region20: #{rel_pos_mha_forward.3} parent=11 // pred_fallthru
          _
        // Predicated region
        $region21: #{rel_pos_mha_forward.3} parent=11 // pred_check
          %p290 = pneg %p173
        $region22: #{rel_pos_mha_forward.3} parent=11 // pred_check_branch
          %292 = sbr.rel (%p290) target = $region24
        $region23: #{rel_pos_mha_forward.3} parent=11 // pred_region
          _
        $region24: #{rel_pos_mha_forward.3} parent=11 // pred_fallthru
          _
        // Predicated region
        $region25: #{rel_pos_mha_forward.3} parent=11 // pred_check
          %p293 = pneg %p220
        $region26: #{rel_pos_mha_forward.3} parent=11 // pred_check_branch
          %295 = sbr.rel (%p293) target = $region28
        $region27: #{rel_pos_mha_forward.3} parent=11 // pred_region
          _
        $region28: #{rel_pos_mha_forward.3} parent=11 // pred_fallthru
          _
        // Predicated region
        $region29: #{rel_pos_mha_forward.3} parent=11 // pred_check
          %p296 = pneg %p241
        $region30: #{rel_pos_mha_forward.3} parent=11 // pred_check_branch
          %298 = sbr.rel (%p296) target = $region32
        $region31: #{rel_pos_mha_forward.3} parent=11 // pred_region
          _
        $region32: #{rel_pos_mha_forward.3} parent=11 // pred_fallthru
          _
      $region12: #{rel_pos_mha_forward.3} parent=5 // pred_fallthru
        _
      %p299 = scmp.lt.s32.totalorder %s18, 2
      // Predicated region
      $region33: #{rel_pos_mha_forward.3} parent=5 // pred_check
        %p300 = pneg %p299
      $region34: #{rel_pos_mha_forward.3} parent=5 // pred_check_branch
        %302 = sbr.rel (%p300) target = $region36
      $region35: #{rel_pos_mha_forward.3} parent=5 // pred_region
        // Predicated region
        $region37: #{rel_pos_mha_forward.3} parent=35 // pred_check
          %p303 = pneg %p52
        $region38: #{rel_pos_mha_forward.3} parent=35 // pred_check_branch
          %305 = sbr.rel (%p303) target = $region40
        $region39: #{rel_pos_mha_forward.3} parent=35 // pred_region
          %p306 = scmp.lt.s32.totalorder %s25, 1
          %s307 = scalar_select %p306, %s25, 1
          %p308 = scmp.lt.s32.totalorder %s26, 0
          %s309 = scalar_select %p308, %s26, 0
          %s310 = sadd.s32 %s309, %s307
          %s311 = smul.addr %s310, 4
          %s312 = scalar_lea.vmem %s0, %s311
        $region40: #{rel_pos_mha_forward.3} parent=35 // pred_fallthru
          _
        // Predicated region
        $region41: #{rel_pos_mha_forward.3} parent=35 // pred_check
          %p313 = pneg %p78
        $region42: #{rel_pos_mha_forward.3} parent=35 // pred_check_branch
          %315 = sbr.rel (%p313) target = $region44
        $region43: #{rel_pos_mha_forward.3} parent=35 // pred_region
          %p316 = scmp.lt.s32.totalorder %s25, 1
          %s317 = scalar_select %p316, %s25, 1
          %s318 = smul.addr %s317, 4
          %s319 = scalar_lea.vmem %s1, %s318
        $region44: #{rel_pos_mha_forward.3} parent=35 // pred_fallthru
          _
        // Predicated region
        $region45: #{rel_pos_mha_forward.3} parent=35 // pred_check
          %p320 = pneg %p104
        $region46: #{rel_pos_mha_forward.3} parent=35 // pred_check_branch
          %322 = sbr.rel (%p320) target = $region48
        $region47: #{rel_pos_mha_forward.3} parent=35 // pred_region
          %p323 = scmp.lt.s32.totalorder %s25, 1
          %s324 = scalar_select %p323, %s25, 1
          %s325 = smul.addr %s324, 4
          %s326 = scalar_lea.vmem %s2, %s325
        $region48: #{rel_pos_mha_forward.3} parent=35 // pred_fallthru
          _
        // Predicated region
        $region49: #{rel_pos_mha_forward.3} parent=35 // pred_check
          %p327 = pneg %p193
        $region50: #{rel_pos_mha_forward.3} parent=35 // pred_check_branch
          %329 = sbr.rel (%p327) target = $region52
        $region51: #{rel_pos_mha_forward.3} parent=35 // pred_region
          %p330 = scmp.lt.s32.totalorder %s25, 1
          %s331 = scalar_select %p330, %s25, 1
          %s332 = scalar_lea.vmem %s6, %s331
        $region52: #{rel_pos_mha_forward.3} parent=35 // pred_fallthru
          _
      $region36: #{rel_pos_mha_forward.3} parent=5 // pred_fallthru
        _
      %p333 = scmp.le.s32.totalorder 1, %s18
      %p334 = scmp.lt.s32.totalorder %s18, 3
      %p335 = pnand %p333, %p334
      %p336 = pneg %p335
      // Predicated region
      $region53: #{rel_pos_mha_forward.3} parent=5 // pred_check
        _
      $region54: #{rel_pos_mha_forward.3} parent=5 // pred_check_branch
        %338 = sbr.rel (%p335) target = $region56
      $region55: #{rel_pos_mha_forward.3} parent=5 // pred_region
        %s339 = ssub.s32 %s18, 1
        %p340 = scmp.lt.s32.totalorder %s27, 1
        %s341 = scalar_select %p340, %s27, 1
        %p342 = scmp.lt.s32.totalorder %s28, 0
        %s343 = scalar_select %p342, %s28, 0
        %s344 = sadd.s32 %s343, %s341
        %s345 = smul.addr %s344, 4
        %s346 = scalar_lea.vmem %s0, %s345
        %p347 = pneg %p58
        %p348 = pneg %p55
        %p349 = scmp.lt.s32.totalorder %s27, 1
        %s350 = scalar_select %p349, %s27, 1
        %s351 = smul.addr %s350, 4
        %s352 = scalar_lea.vmem %s1, %s351
        %p353 = pneg %p84
        %p354 = pneg %p81
        %p355 = scmp.lt.s32.totalorder %s27, 1
        %s356 = scalar_select %p355, %s27, 1
        %s357 = smul.addr %s356, 4
        %s358 = scalar_lea.vmem %s2, %s357
        %p359 = pneg %p110
        %p360 = pneg %p107
        %p361 = pneg %p131
        %p362 = pneg %p128
        %p363 = pneg %p152
        %p364 = pneg %p149
        %p365 = pneg %p173
        %p366 = pneg %p170
        %p367 = scmp.lt.s32.totalorder %s27, 1
        %s368 = scalar_select %p367, %s27, 1
        %s369 = scalar_lea.vmem %s6, %s368
        %p370 = pneg %p199
        %p371 = pneg %p196
        %p372 = pneg %p220
        %p373 = pneg %p217
        %p374 = pneg %p241
        %p375 = pneg %p238
        %p376 = pneg %p269
        %p377 = pneg %p266
        %s378 = sand.u32 %s256, 1
        %s379 = scalar_lea.sflag [#allocation4], %s378
        %s380 = sand.u32 %s256, 1
        %s381 = smul.addr %s380, 8
        %s382 = scalar_lea.vmem [#allocation3], %s381
        %p383 = scmp.lt.s32.totalorder %s27, 1
        %s384 = scalar_select %p383, %s27, 1
        %p385 = scmp.lt.s32.totalorder %s28, 0
        %s386 = scalar_select %p385, %s28, 0
        %s387 = sadd.s32 %s386, %s384
        %s388 = smul.addr %s387, 4
        %s389 = scalar_lea.vmem %s0, %s388
        %p390 = scmp.lt.s32.totalorder %s27, 1
        %s391 = scalar_select %p390, %s27, 1
        %s392 = smul.addr %s391, 4
        %s393 = scalar_lea.vmem %s1, %s392
        %p394 = scmp.lt.s32.totalorder %s27, 1
        %s395 = scalar_select %p394, %s27, 1
        %s396 = smul.addr %s395, 4
        %s397 = scalar_lea.vmem %s2, %s396
        %p398 = scmp.lt.s32.totalorder %s27, 1
        %s399 = scalar_select %p398, %s27, 1
        %s400 = scalar_lea.vmem %s6, %s399
        %v402 = vld [vmem:[%s389] sm:$0xf]
        %v403 = vld [vmem:[%s400] sm:$0x1]
        %v404 = vsub.f32 %v403, 1.0
        %v405 = vmul.f32 %v404, 1e+30
        %v406 = vld [vmem:[%s393] sm:$0xf]
        %v407 = vunpack.c.l.bf16 %v406
        %v408 = vld [vmem:[%s3] sm:$0xf]
        %v409 = vunpack.c.l.bf16 %v408
        %v410 = vadd.f32 %v407, %v409
        %411 = vxpose.xlu0.b32.start [1/16] %v410, 128
        %412 = vxpose.xlu0.b32.cont [2/16] 0.0, 128
        %413 = vxpose.xlu0.b32.cont [3/16] 0.0, 128
        %414 = vxpose.xlu0.b32.cont [4/16] 0.0, 128
        %415 = vxpose.xlu0.b32.cont [5/16] 0.0, 128
        %416 = vxpose.xlu0.b32.cont [6/16] 0.0, 128
        %417 = vxpose.xlu0.b32.cont [7/16] 0.0, 128
        %418 = vxpose.xlu0.b32.cont [8/16] 0.0, 128
        %419 = vxpose.xlu0.b32.cont [9/16] 0.0, 128
        %420 = vxpose.xlu0.b32.cont [10/16] 0.0, 128
        %421 = vxpose.xlu0.b32.cont [11/16] 0.0, 128
        %422 = vxpose.xlu0.b32.cont [12/16] 0.0, 128
        %423 = vxpose.xlu0.b32.cont [13/16] 0.0, 128
        %424 = vxpose.xlu0.b32.cont [14/16] 0.0, 128
        %425 = vxpose.xlu0.b32.cont [15/16] 0.0, 128
        %426 = vxpose.xlu0.b32.end [16/16] 0.0, 128
        %v427 = vpop.trf.xlu0
        %v428 = vpop.trf.xlu0
        %v429 = vpop.trf.xlu0
        %v430 = vpop.trf.xlu0
        %v431 = vpop.trf.xlu0
        %v432 = vpop.trf.xlu0
        %v433 = vpop.trf.xlu0
        %v434 = vpop.trf.xlu0
        %v435 = vpop.trf.xlu0
        %v436 = vpop.trf.xlu0
        %v437 = vpop.trf.xlu0
        %v438 = vpop.trf.xlu0
        %v439 = vpop.trf.xlu0
        %v440 = vpop.trf.xlu0
        %v441 = vpop.trf.xlu0
        %v442 = vpop.trf.xlu0
        %v443 = vpack.c.bf16 %v428, %v427
        %v444 = vpack.c.bf16 %v430, %v429
        %v445 = vld [vmem:[%s4] sm:$0x3]
        %v446 = vld [vmem:[%s5] sm:$0xf]
        %vm447 = vcmask 261120
        %v449 = vsel %vm447, %v445, 0
        %451 = vmatprep.subr.bf16.mxu0 0
        %452 = vmatpush1.bf16.msra.mxu0 %v443
        %453 = vmatprep.subr.bf16.mxu0 0
        %454 = vmatpush1.bf16.msra.mxu0 %v444
        %455 = vmatprep.subr.bf16.mxu0 0
        %456 = vmatpush1.bf16.msra.mxu0 0
        %457 = vmatprep.subr.bf16.mxu0 0
        %458 = vmatpush1.bf16.msra.mxu0 0
        %459 = vmatprep.subr.bf16.mxu0 0
        %460 = vmatpush1.bf16.msra.mxu0 0
        %461 = vmatprep.subr.bf16.mxu0 0
        %462 = vmatpush1.bf16.msra.mxu0 0
        %463 = vmatprep.subr.bf16.mxu0 0
        %464 = vmatpush1.bf16.msra.mxu0 0
        %465 = vmatprep.subr.bf16.mxu0 0
        %466 = vmatpush1.bf16.msra.mxu0 0
        %467 = vmatprep.subr.bf16.mxu0 0
        %468 = vmatpush1.bf16.msra.mxu0 0
        %469 = vmatprep.subr.bf16.mxu0 0
        %470 = vmatpush1.bf16.msra.mxu0 0
        %471 = vmatprep.subr.bf16.mxu0 0
        %472 = vmatpush1.bf16.msra.mxu0 0
        %473 = vmatprep.subr.bf16.mxu0 0
        %474 = vmatpush1.bf16.msra.mxu0 0
        %475 = vmatprep.subr.bf16.mxu0 0
        %476 = vmatpush1.bf16.msra.mxu0 0
        %477 = vmatprep.subr.bf16.mxu0 0
        %478 = vmatpush1.bf16.msra.mxu0 0
        %479 = vmatprep.subr.bf16.mxu0 0
        %480 = vmatpush1.bf16.msra.mxu0 0
        %481 = vmatprep.subr.bf16.mxu0 0
        %482 = vmatpush1.bf16.msra.mxu0 0
        %483 = vmatprep.mubr.bf16.mxu0 0
        %484 = vmatmul.mubr.bf16.gmra.mrb[0].mxu0 %v449
        %v485 = vpop.f32.mrb[0].mxu0
        %v486 = vadd.f32 %v446, %v485
        %v487 = vpop.f32.mrb[0].mxu0
        %v488 = vpop.f32.mrb[0].mxu0
        %v489 = vpop.f32.mrb[0].mxu0
        %490 = vdwg.mxu0
        %v491 = vlaneseq
        %v492 = vshrl.u32 %v491, 7
        %v493 = vsub.s32 0, %v492
        %v494 = vrot.slane %v486, %v493
        %vm495 = vcmask 64512
        %v497 = vsel %vm495, %v402, 0
        %vm499 = vcmask 1043456
        %v501 = vsel %vm499, %v443, 0
        %503 = vmatprep.subr.bf16.mxu0 0
        %504 = vmatpush1.bf16.msra.mxu0 %v501
        %505 = vmatprep.subr.bf16.mxu0 0
        %506 = vmatpush1.bf16.msra.mxu0 0
        %507 = vmatprep.subr.bf16.mxu0 0
        %508 = vmatpush1.bf16.msra.mxu0 0
        %509 = vmatprep.subr.bf16.mxu0 0
        %510 = vmatpush1.bf16.msra.mxu0 0
        %511 = vmatprep.subr.bf16.mxu0 0
        %512 = vmatpush1.bf16.msra.mxu0 0
        %513 = vmatprep.subr.bf16.mxu0 0
        %514 = vmatpush1.bf16.msra.mxu0 0
        %515 = vmatprep.subr.bf16.mxu0 0
        %516 = vmatpush1.bf16.msra.mxu0 0
        %517 = vmatprep.subr.bf16.mxu0 0
        %518 = vmatpush1.bf16.msra.mxu0 0
        %519 = vmatprep.subr.bf16.mxu0 0
        %520 = vmatpush1.bf16.msra.mxu0 0
        %521 = vmatprep.subr.bf16.mxu0 0
        %522 = vmatpush1.bf16.msra.mxu0 0
        %523 = vmatprep.subr.bf16.mxu0 0
        %524 = vmatpush1.bf16.msra.mxu0 0
        %525 = vmatprep.subr.bf16.mxu0 0
        %526 = vmatpush1.bf16.msra.mxu0 0
        %527 = vmatprep.subr.bf16.mxu0 0
        %528 = vmatpush1.bf16.msra.mxu0 0
        %529 = vmatprep.subr.bf16.mxu0 0
        %530 = vmatpush1.bf16.msra.mxu0 0
        %531 = vmatprep.subr.bf16.mxu0 0
        %532 = vmatpush1.bf16.msra.mxu0 0
        %533 = vmatprep.subr.bf16.mxu0 0
        %534 = vmatpush1.bf16.msra.mxu0 0
        %535 = vmatprep.mubr.bf16.mxu0 0
        %536 = vmatmul.mubr.bf16.gmra.mrb[0].mxu0 %v497
        %v537 = vpop.f32.mrb[0].mxu0
        %v538 = vadd.f32 %v494, %v537
        %v539 = vpop.f32.mrb[0].mxu0
        %v540 = vpop.f32.mrb[0].mxu0
        %v541 = vpop.f32.mrb[0].mxu0
        %542 = vdwg.mxu0
        %v544 = vlaneseq
        %v545 = vshrl.u32 %v544, 7
        %v546 = vsub.s32 0, %v545
        %v547 = vrot.slane %v405, %v546
        %v549 = vadd.f32 %v538, %v547
        %v550 = vsel %vm495, %v549, -inf
        %551 = vmax.xlane.f32.xlu0 %v550
        %v552 = vpop.xlane.xlu0 %551
        %v553 = vsub.f32 %v549, %v552
        %v554 = vmul.f32 %v553, 1.442695
        %v555 = vpow.pop %v554
        %v556 = vsel %vm495, %v555, 0.0
        %557 = vadd.xlane.f32.xlu0 %v556
        %v558 = vpop.xlane.xlu0 %557
        %v559 = vrcp.pop %v558
        %v560 = vmul.f32 %v555, %v559
        %v562 = vlaneseq
        %v563 = vshrl.u32 %v562, 7
        %v564 = vsub.s32 0, %v563
        %v565 = vrot.slane %v403, %v564
        %v567 = vmul.f32 %v560, %v565
        %v568 = vpack.c.bf16 %v567, %v567
        %v569 = vld [vmem:[%s397] sm:$0xf]
        %v571 = vsel %vm495, %v568, 0
        %v574 = vsel %vm499, %v569, 0
        %576 = vmatprep.subr.bf16.mxu0 0
        %577 = vmatpush1.bf16.msra.mxu0 %v574
        %578 = vmatprep.subr.bf16.mxu0 0
        %579 = vmatpush1.bf16.msra.mxu0 0
        %580 = vmatprep.subr.bf16.mxu0 0
        %581 = vmatpush1.bf16.msra.mxu0 0
        %582 = vmatprep.subr.bf16.mxu0 0
        %583 = vmatpush1.bf16.msra.mxu0 0
        %584 = vmatprep.subr.bf16.mxu0 0
        %585 = vmatpush1.bf16.msra.mxu0 0
        %586 = vmatprep.subr.bf16.mxu0 0
        %587 = vmatpush1.bf16.msra.mxu0 0
        %588 = vmatprep.subr.bf16.mxu0 0
        %589 = vmatpush1.bf16.msra.mxu0 0
        %590 = vmatprep.subr.bf16.mxu0 0
        %591 = vmatpush1.bf16.msra.mxu0 0
        %592 = vmatprep.subr.bf16.mxu0 0
        %593 = vmatpush1.bf16.msra.mxu0 0
        %594 = vmatprep.subr.bf16.mxu0 0
        %595 = vmatpush1.bf16.msra.mxu0 0
        %596 = vmatprep.subr.bf16.mxu0 0
        %597 = vmatpush1.bf16.msra.mxu0 0
        %598 = vmatprep.subr.bf16.mxu0 0
        %599 = vmatpush1.bf16.msra.mxu0 0
        %600 = vmatprep.subr.bf16.mxu0 0
        %601 = vmatpush1.bf16.msra.mxu0 0
        %602 = vmatprep.subr.bf16.mxu0 0
        %603 = vmatpush1.bf16.msra.mxu0 0
        %604 = vmatprep.subr.bf16.mxu0 0
        %605 = vmatpush1.bf16.msra.mxu0 0
        %606 = vmatprep.subr.bf16.mxu0 0
        %607 = vmatpush1.bf16.msra.mxu0 0
        %608 = vmatprep.mubr.bf16.mxu0 0
        %609 = vmatmul.mubr.bf16.gmra.mrb[0].mxu0 %v571
        %v610 = vpop.f32.mrb[0].mxu0
        %v611 = vadd.f32 0.0, %v610
        %v612 = vpop.f32.mrb[0].mxu0
        %v613 = vpop.f32.mrb[0].mxu0
        %v614 = vpop.f32.mrb[0].mxu0
        %615 = vdwg.mxu0
        %616 = vst.msk [vmem:[#allocation2] sm:$0xff] %vm495, %v611
        %v617 = vlaneseq
        %v618 = vshrl.u32 %v617, 7
        %v619 = vsub.s32 1, %v618
        %v620 = vrot.slane %v486, %v619
        %v622 = vunpack.c.l.b16 %v402
        %v623 = vpack.c.b16 %v622, %v622
        %624 = vrot.lane.b32.xlu0 %v623, 120
        %v625 = vpop.permute.xlu0 %624
        %v627 = vrot.slane %v443, 4
        %v629 = vsel %vm495, %v625, 0
        %v632 = vsel %vm499, %v627, 0
        %634 = vmatprep.subr.bf16.mxu0 0
        %635 = vmatpush1.bf16.msra.mxu0 %v632
        %636 = vmatprep.subr.bf16.mxu0 0
        %637 = vmatpush1.bf16.msra.mxu0 0
        %638 = vmatprep.subr.bf16.mxu0 0
        %639 = vmatpush1.bf16.msra.mxu0 0
        %640 = vmatprep.subr.bf16.mxu0 0
        %641 = vmatpush1.bf16.msra.mxu0 0
        %642 = vmatprep.subr.bf16.mxu0 0
        %643 = vmatpush1.bf16.msra.mxu0 0
        %644 = vmatprep.subr.bf16.mxu0 0
        %645 = vmatpush1.bf16.msra.mxu0 0
        %646 = vmatprep.subr.bf16.mxu0 0
        %647 = vmatpush1.bf16.msra.mxu0 0
        %648 = vmatprep.subr.bf16.mxu0 0
        %649 = vmatpush1.bf16.msra.mxu0 0
        %650 = vmatprep.subr.bf16.mxu0 0
        %651 = vmatpush1.bf16.msra.mxu0 0
        %652 = vmatprep.subr.bf16.mxu0 0
        %653 = vmatpush1.bf16.msra.mxu0 0
        %654 = vmatprep.subr.bf16.mxu0 0
        %655 = vmatpush1.bf16.msra.mxu0 0
        %656 = vmatprep.subr.bf16.mxu0 0
        %657 = vmatpush1.bf16.msra.mxu0 0
        %658 = vmatprep.subr.bf16.mxu0 0
        %659 = vmatpush1.bf16.msra.mxu0 0
        %660 = vmatprep.subr.bf16.mxu0 0
        %661 = vmatpush1.bf16.msra.mxu0 0
        %662 = vmatprep.subr.bf16.mxu0 0
        %663 = vmatpush1.bf16.msra.mxu0 0
        %664 = vmatprep.subr.bf16.mxu0 0
        %665 = vmatpush1.bf16.msra.mxu0 0
        %666 = vmatprep.mubr.bf16.mxu0 0
        %667 = vmatmul.mubr.bf16.gmra.mrb[0].mxu0 %v629
        %v668 = vpop.f32.mrb[0].mxu0
        %v669 = vadd.f32 %v620, %v668
        %v670 = vpop.f32.mrb[0].mxu0
        %v671 = vpop.f32.mrb[0].mxu0
        %v672 = vpop.f32.mrb[0].mxu0
        %673 = vdwg.mxu0
        %v674 = vadd.f32 %v669, %v547
        %v675 = vsel %vm495, %v674, -inf
        %676 = vmax.xlane.f32.xlu0 %v675
        %v677 = vpop.xlane.xlu0 %676
        %v678 = vsub.f32 %v674, %v677
        %v679 = vmul.f32 %v678, 1.442695
        %v680 = vpow.pop %v679
        %v681 = vsel %vm495, %v680, 0.0
        %682 = vadd.xlane.f32.xlu0 %v681
        %v683 = vpop.xlane.xlu0 %682
        %v684 = vrcp.pop %v683
        %v685 = vmul.f32 %v680, %v684
        %v686 = vmul.f32 %v685, %v565
        %v687 = vpack.c.bf16 %v686, %v686
        %v688 = vld [vmem:[%s397] sm:$0xf]
        %v690 = vunpack.c.l.b16 %v688
        %v691 = vpack.c.b16 %v690, %v690
        %692 = vrot.lane.b32.xlu0 %v691, 120
        %v693 = vpop.permute.xlu0 %692
        %v695 = vsel %vm495, %v687, 0
        %v698 = vsel %vm499, %v693, 0
        %700 = vmatprep.subr.bf16.mxu0 0
        %701 = vmatpush1.bf16.msra.mxu0 %v698
        %702 = vmatprep.subr.bf16.mxu0 0
        %703 = vmatpush1.bf16.msra.mxu0 0
        %704 = vmatprep.subr.bf16.mxu0 0
        %705 = vmatpush1.bf16.msra.mxu0 0
        %706 = vmatprep.subr.bf16.mxu0 0
        %707 = vmatpush1.bf16.msra.mxu0 0
        %708 = vmatprep.subr.bf16.mxu0 0
        %709 = vmatpush1.bf16.msra.mxu0 0
        %710 = vmatprep.subr.bf16.mxu0 0
        %711 = vmatpush1.bf16.msra.mxu0 0
        %712 = vmatprep.subr.bf16.mxu0 0
        %713 = vmatpush1.bf16.msra.mxu0 0
        %714 = vmatprep.subr.bf16.mxu0 0
        %715 = vmatpush1.bf16.msra.mxu0 0
        %716 = vmatprep.subr.bf16.mxu0 0
        %717 = vmatpush1.bf16.msra.mxu0 0
        %718 = vmatprep.subr.bf16.mxu0 0
        %719 = vmatpush1.bf16.msra.mxu0 0
        %720 = vmatprep.subr.bf16.mxu0 0
        %721 = vmatpush1.bf16.msra.mxu0 0
        %722 = vmatprep.subr.bf16.mxu0 0
        %723 = vmatpush1.bf16.msra.mxu0 0
        %724 = vmatprep.subr.bf16.mxu0 0
        %725 = vmatpush1.bf16.msra.mxu0 0
        %726 = vmatprep.subr.bf16.mxu0 0
        %727 = vmatpush1.bf16.msra.mxu0 0
        %728 = vmatprep.subr.bf16.mxu0 0
        %729 = vmatpush1.bf16.msra.mxu0 0
        %730 = vmatprep.subr.bf16.mxu0 0
        %731 = vmatpush1.bf16.msra.mxu0 0
        %732 = vmatprep.mubr.bf16.mxu0 0
        %733 = vmatmul.mubr.bf16.gmra.mrb[0].mxu0 %v695
        %v734 = vpop.f32.mrb[0].mxu0
        %v735 = vadd.f32 0.0, %v734
        %v736 = vpop.f32.mrb[0].mxu0
        %v737 = vpop.f32.mrb[0].mxu0
        %v738 = vpop.f32.mrb[0].mxu0
        %739 = vdwg.mxu0
        %741 = vrot.lane.b32.xlu0 %v735, 8
        %v742 = vpop.permute.xlu0 %741
        %vm744 = vcmask 130112
        %745 = vst.msk [vmem:[#allocation2] sm:$0xff] %vm744, %v742
        %v746 = vlaneseq
        %v747 = vshrl.u32 %v746, 7
        %v748 = vsub.s32 2, %v747
        %v749 = vrot.slane %v486, %v748
        %750 = vrot.lane.b32.xlu0 %v623, 112
        %v751 = vpop.permute.xlu0 %750
        %v753 = vsel %vm495, %v751, 0
        %v756 = vsel %vm499, %v444, 0
        %758 = vmatprep.subr.bf16.mxu0 0
        %759 = vmatpush1.bf16.msra.mxu0 %v756
        %760 = vmatprep.subr.bf16.mxu0 0
        %761 = vmatpush1.bf16.msra.mxu0 0
        %762 = vmatprep.subr.bf16.mxu0 0
        %763 = vmatpush1.bf16.msra.mxu0 0
        %764 = vmatprep.subr.bf16.mxu0 0
        %765 = vmatpush1.bf16.msra.mxu0 0
        %766 = vmatprep.subr.bf16.mxu0 0
        %767 = vmatpush1.bf16.msra.mxu0 0
        %768 = vmatprep.subr.bf16.mxu0 0
        %769 = vmatpush1.bf16.msra.mxu0 0
        %770 = vmatprep.subr.bf16.mxu0 0
        %771 = vmatpush1.bf16.msra.mxu0 0
        %772 = vmatprep.subr.bf16.mxu0 0
        %773 = vmatpush1.bf16.msra.mxu0 0
        %774 = vmatprep.subr.bf16.mxu0 0
        %775 = vmatpush1.bf16.msra.mxu0 0
        %776 = vmatprep.subr.bf16.mxu0 0
        %777 = vmatpush1.bf16.msra.mxu0 0
        %778 = vmatprep.subr.bf16.mxu0 0
        %779 = vmatpush1.bf16.msra.mxu0 0
        %780 = vmatprep.subr.bf16.mxu0 0
        %781 = vmatpush1.bf16.msra.mxu0 0
        %782 = vmatprep.subr.bf16.mxu0 0
        %783 = vmatpush1.bf16.msra.mxu0 0
        %784 = vmatprep.subr.bf16.mxu0 0
        %785 = vmatpush1.bf16.msra.mxu0 0
        %786 = vmatprep.subr.bf16.mxu0 0
        %787 = vmatpush1.bf16.msra.mxu0 0
        %788 = vmatprep.subr.bf16.mxu0 0
        %789 = vmatpush1.bf16.msra.mxu0 0
        %790 = vmatprep.mubr.bf16.mxu0 0
        %791 = vmatmul.mubr.bf16.gmra.mrb[0].mxu0 %v753
        %v792 = vpop.f32.mrb[0].mxu0
        %v793 = vadd.f32 %v749, %v792
        %v794 = vpop.f32.mrb[0].mxu0
        %v795 = vpop.f32.mrb[0].mxu0
        %v796 = vpop.f32.mrb[0].mxu0
        %797 = vdwg.mxu0
        %v798 = vadd.f32 %v793, %v547
        %v799 = vsel %vm495, %v798, -inf
        %800 = vmax.xlane.f32.xlu0 %v799
        %v801 = vpop.xlane.xlu0 %800
        %v802 = vsub.f32 %v798, %v801
        %v803 = vmul.f32 %v802, 1.442695
        %v804 = vpow.pop %v803
        %v805 = vsel %vm495, %v804, 0.0
        %806 = vadd.xlane.f32.xlu0 %v805
        %v807 = vpop.xlane.xlu0 %806
        %v808 = vrcp.pop %v807
        %v809 = vmul.f32 %v804, %v808
        %v810 = vmul.f32 %v809, %v565
        %v811 = vpack.c.bf16 %v810, %v810
        %v812 = vld [vmem:[%s397] sm:$0xf]
        %v814 = vunpack.c.l.b16 %v812
        %v815 = vpack.c.b16 %v814, %v814
        %816 = vrot.lane.b32.xlu0 %v815, 112
        %v817 = vpop.permute.xlu0 %816
        %v819 = vsel %vm495, %v811, 0
        %v822 = vsel %vm499, %v817, 0
        %824 = vmatprep.subr.bf16.mxu0 0
        %825 = vmatpush1.bf16.msra.mxu0 %v822
        %826 = vmatprep.subr.bf16.mxu0 0
        %827 = vmatpush1.bf16.msra.mxu0 0
        %828 = vmatprep.subr.bf16.mxu0 0
        %829 = vmatpush1.bf16.msra.mxu0 0
        %830 = vmatprep.subr.bf16.mxu0 0
        %831 = vmatpush1.bf16.msra.mxu0 0
        %832 = vmatprep.subr.bf16.mxu0 0
        %833 = vmatpush1.bf16.msra.mxu0 0
        %834 = vmatprep.subr.bf16.mxu0 0
        %835 = vmatpush1.bf16.msra.mxu0 0
        %836 = vmatprep.subr.bf16.mxu0 0
        %837 = vmatpush1.bf16.msra.mxu0 0
        %838 = vmatprep.subr.bf16.mxu0 0
        %839 = vmatpush1.bf16.msra.mxu0 0
        %840 = vmatprep.subr.bf16.mxu0 0
        %841 = vmatpush1.bf16.msra.mxu0 0
        %842 = vmatprep.subr.bf16.mxu0 0
        %843 = vmatpush1.bf16.msra.mxu0 0
        %844 = vmatprep.subr.bf16.mxu0 0
        %845 = vmatpush1.bf16.msra.mxu0 0
        %846 = vmatprep.subr.bf16.mxu0 0
        %847 = vmatpush1.bf16.msra.mxu0 0
        %848 = vmatprep.subr.bf16.mxu0 0
        %849 = vmatpush1.bf16.msra.mxu0 0
        %850 = vmatprep.subr.bf16.mxu0 0
        %851 = vmatpush1.bf16.msra.mxu0 0
        %852 = vmatprep.subr.bf16.mxu0 0
        %853 = vmatpush1.bf16.msra.mxu0 0
        %854 = vmatprep.subr.bf16.mxu0 0
        %855 = vmatpush1.bf16.msra.mxu0 0
        %856 = vmatprep.mubr.bf16.mxu0 0
        %857 = vmatmul.mubr.bf16.gmra.mrb[0].mxu0 %v819
        %v858 = vpop.f32.mrb[0].mxu0
        %v859 = vadd.f32 0.0, %v858
        %v860 = vpop.f32.mrb[0].mxu0
        %v861 = vpop.f32.mrb[0].mxu0
        %v862 = vpop.f32.mrb[0].mxu0
        %863 = vdwg.mxu0
        %865 = vrot.lane.b32.xlu0 %v859, 16
        %v866 = vpop.permute.xlu0 %865
        %vm868 = vcmask 195712
        %869 = vst.msk [vmem:[#allocation2] sm:$0xff] %vm868, %v866
        %v870 = vlaneseq
        %v871 = vshrl.u32 %v870, 7
        %v872 = vsub.s32 3, %v871
        %v873 = vrot.slane %v486, %v872
        %874 = vrot.lane.b32.xlu0 %v623, 104
        %v875 = vpop.permute.xlu0 %874
        %v877 = vrot.slane %v444, 4
        %v879 = vsel %vm495, %v875, 0
        %v882 = vsel %vm499, %v877, 0
        %884 = vmatprep.subr.bf16.mxu0 0
        %885 = vmatpush1.bf16.msra.mxu0 %v882
        %886 = vmatprep.subr.bf16.mxu0 0
        %887 = vmatpush1.bf16.msra.mxu0 0
        %888 = vmatprep.subr.bf16.mxu0 0
        %889 = vmatpush1.bf16.msra.mxu0 0
        %890 = vmatprep.subr.bf16.mxu0 0
        %891 = vmatpush1.bf16.msra.mxu0 0
        %892 = vmatprep.subr.bf16.mxu0 0
        %893 = vmatpush1.bf16.msra.mxu0 0
        %894 = vmatprep.subr.bf16.mxu0 0
        %895 = vmatpush1.bf16.msra.mxu0 0
        %896 = vmatprep.subr.bf16.mxu0 0
        %897 = vmatpush1.bf16.msra.mxu0 0
        %898 = vmatprep.subr.bf16.mxu0 0
        %899 = vmatpush1.bf16.msra.mxu0 0
        %900 = vmatprep.subr.bf16.mxu0 0
        %901 = vmatpush1.bf16.msra.mxu0 0
        %902 = vmatprep.subr.bf16.mxu0 0
        %903 = vmatpush1.bf16.msra.mxu0 0
        %904 = vmatprep.subr.bf16.mxu0 0
        %905 = vmatpush1.bf16.msra.mxu0 0
        %906 = vmatprep.subr.bf16.mxu0 0
        %907 = vmatpush1.bf16.msra.mxu0 0
        %908 = vmatprep.subr.bf16.mxu0 0
        %909 = vmatpush1.bf16.msra.mxu0 0
        %910 = vmatprep.subr.bf16.mxu0 0
        %911 = vmatpush1.bf16.msra.mxu0 0
        %912 = vmatprep.subr.bf16.mxu0 0
        %913 = vmatpush1.bf16.msra.mxu0 0
        %914 = vmatprep.subr.bf16.mxu0 0
        %915 = vmatpush1.bf16.msra.mxu0 0
        %916 = vmatprep.mubr.bf16.mxu0 0
        %917 = vmatmul.mubr.bf16.gmra.mrb[0].mxu0 %v879
        %v918 = vpop.f32.mrb[0].mxu0
        %v919 = vadd.f32 %v873, %v918
        %v920 = vpop.f32.mrb[0].mxu0
        %v921 = vpop.f32.mrb[0].mxu0
        %v922 = vpop.f32.mrb[0].mxu0
        %923 = vdwg.mxu0
        %v924 = vadd.f32 %v919, %v547
        %v925 = vsel %vm495, %v924, -inf
        %926 = vmax.xlane.f32.xlu0 %v925
        %v927 = vpop.xlane.xlu0 %926
        %v928 = vsub.f32 %v924, %v927
        %v929 = vmul.f32 %v928, 1.442695
        %v930 = vpow.pop %v929
        %v931 = vsel %vm495, %v930, 0.0
        %932 = vadd.xlane.f32.xlu0 %v931
        %v933 = vpop.xlane.xlu0 %932
        %v934 = vrcp.pop %v933
        %v935 = vmul.f32 %v930, %v934
        %v936 = vmul.f32 %v935, %v565
        %v937 = vpack.c.bf16 %v936, %v936
        %v938 = vld [vmem:[%s397] sm:$0xf]
        %v940 = vunpack.c.l.b16 %v938
        %v941 = vpack.c.b16 %v940, %v940
        %942 = vrot.lane.b32.xlu0 %v941, 104
        %v943 = vpop.permute.xlu0 %942
        %v945 = vsel %vm495, %v937, 0
        %v948 = vsel %vm499, %v943, 0
        %950 = vmatprep.subr.bf16.mxu0 0
        %951 = vmatpush1.bf16.msra.mxu0 %v948
        %952 = vmatprep.subr.bf16.mxu0 0
        %953 = vmatpush1.bf16.msra.mxu0 0
        %954 = vmatprep.subr.bf16.mxu0 0
        %955 = vmatpush1.bf16.msra.mxu0 0
        %956 = vmatprep.subr.bf16.mxu0 0
        %957 = vmatpush1.bf16.msra.mxu0 0
        %958 = vmatprep.subr.bf16.mxu0 0
        %959 = vmatpush1.bf16.msra.mxu0 0
        %960 = vmatprep.subr.bf16.mxu0 0
        %961 = vmatpush1.bf16.msra.mxu0 0
        %962 = vmatprep.subr.bf16.mxu0 0
        %963 = vmatpush1.bf16.msra.mxu0 0
        %964 = vmatprep.subr.bf16.mxu0 0
        %965 = vmatpush1.bf16.msra.mxu0 0
        %966 = vmatprep.subr.bf16.mxu0 0
        %967 = vmatpush1.bf16.msra.mxu0 0
        %968 = vmatprep.subr.bf16.mxu0 0
        %969 = vmatpush1.bf16.msra.mxu0 0
        %970 = vmatprep.subr.bf16.mxu0 0
        %971 = vmatpush1.bf16.msra.mxu0 0
        %972 = vmatprep.subr.bf16.mxu0 0
        %973 = vmatpush1.bf16.msra.mxu0 0
        %974 = vmatprep.subr.bf16.mxu0 0
        %975 = vmatpush1.bf16.msra.mxu0 0
        %976 = vmatprep.subr.bf16.mxu0 0
        %977 = vmatpush1.bf16.msra.mxu0 0
        %978 = vmatprep.subr.bf16.mxu0 0
        %979 = vmatpush1.bf16.msra.mxu0 0
        %980 = vmatprep.subr.bf16.mxu0 0
        %981 = vmatpush1.bf16.msra.mxu0 0
        %982 = vmatprep.mubr.bf16.mxu0 0
        %983 = vmatmul.mubr.bf16.gmra.mrb[0].mxu0 %v945
        %v984 = vpop.f32.mrb[0].mxu0
        %v985 = vadd.f32 0.0, %v984
        %v986 = vpop.f32.mrb[0].mxu0
        %v987 = vpop.f32.mrb[0].mxu0
        %v988 = vpop.f32.mrb[0].mxu0
        %989 = vdwg.mxu0
        %991 = vrot.lane.b32.xlu0 %v985, 24
        %v992 = vpop.permute.xlu0 %991
        %vm994 = vcmask 261312
        %995 = vst.msk [vmem:[#allocation2] sm:$0xff] %vm994, %v992
        %v996 = vld [vmem:[#allocation2] sm:$0xff]
        %v997 = vpack.c.bf16 %v996, %v996
        %v998 = vld [vmem:[%s7] sm:$0xf]
        %v999 = vld [vmem:[%s7 + $0x4] sm:$0xf]
        %v1000 = vld [vmem:[%s7 + $0x8] sm:$0xf]
        %v1001 = vld [vmem:[%s7 + $0xc] sm:$0xf]
        %v1002 = vld [vmem:[%s8] sm:$0x1]
        %v1004 = vlaneseq
        %v1005 = vshrl.u32 %v1004, 7
        %v1006 = vsub.s32 0, %v1005
        %v1007 = vrot.slane %v1002, %v1006
        %v1013 = vunpack.c.l.b16 %v998
        %v1014 = vunpack.c.l.b16 %v999
        %v1015 = vunpack.c.l.b16 %v1000
        %v1016 = vunpack.c.l.b16 %v1001
        %v1017 = vpack.c.b16 %v1014, %v1013
        %v1018 = vpack.c.b16 %v1016, %v1015
        %v1022 = vsel %vm447, %v997, 0
        %1024 = vmatprep.subr.bf16.mxu0 0
        %1025 = vmatpush1.bf16.msra.mxu0 %v1017
        %1026 = vmatprep.subr.bf16.mxu0 0
        %1027 = vmatpush1.bf16.msra.mxu0 %v1018
        %1028 = vmatprep.subr.bf16.mxu0 0
        %1029 = vmatpush1.bf16.msra.mxu0 0
        %1030 = vmatprep.subr.bf16.mxu0 0
        %1031 = vmatpush1.bf16.msra.mxu0 0
        %1032 = vmatprep.subr.bf16.mxu0 0
        %1033 = vmatpush1.bf16.msra.mxu0 0
        %1034 = vmatprep.subr.bf16.mxu0 0
        %1035 = vmatpush1.bf16.msra.mxu0 0
        %1036 = vmatprep.subr.bf16.mxu0 0
        %1037 = vmatpush1.bf16.msra.mxu0 0
        %1038 = vmatprep.subr.bf16.mxu0 0
        %1039 = vmatpush1.bf16.msra.mxu0 0
        %1040 = vmatprep.subr.bf16.mxu0 0
        %1041 = vmatpush1.bf16.msra.mxu0 0
        %1042 = vmatprep.subr.bf16.mxu0 0
        %1043 = vmatpush1.bf16.msra.mxu0 0
        %1044 = vmatprep.subr.bf16.mxu0 0
        %1045 = vmatpush1.bf16.msra.mxu0 0
        %1046 = vmatprep.subr.bf16.mxu0 0
        %1047 = vmatpush1.bf16.msra.mxu0 0
        %1048 = vmatprep.subr.bf16.mxu0 0
        %1049 = vmatpush1.bf16.msra.mxu0 0
        %1050 = vmatprep.subr.bf16.mxu0 0
        %1051 = vmatpush1.bf16.msra.mxu0 0
        %1052 = vmatprep.subr.bf16.mxu0 0
        %1053 = vmatpush1.bf16.msra.mxu0 0
        %1054 = vmatprep.subr.bf16.mxu0 0
        %1055 = vmatpush1.bf16.msra.mxu0 0
        %1056 = vmatprep.mubr.bf16.mxu0 0
        %1057 = vmatmul.mubr.bf16.gmra.mrb[0].mxu0 %v1022
        %v1058 = vpop.f32.mrb[0].mxu0
        %v1059 = vadd.f32 %v1007, %v1058
        %v1060 = vpop.f32.mrb[0].mxu0
        %v1061 = vpop.f32.mrb[0].mxu0
        %v1062 = vpop.f32.mrb[0].mxu0
        %1063 = vdwg.mxu0
        %1064 = vst.msk [vmem:[%s382] sm:$0xff] %vm447, %v1059
        %s1065 = sand.u32 %s256, 1
        %s1066 = scalar_lea.sflag [#allocation4], %s1065
        %s1067 = sand.u32 %s256, 1
        %s1068 = smul.addr %s1067, 8
        %s1069 = scalar_lea.vmem [#allocation3], %s1068
        // Predicated region
        $region57: #{rel_pos_mha_forward.3} parent=55 // pred_check
          %p1070 = pneg %p266
        $region58: #{rel_pos_mha_forward.3} parent=55 // pred_check_branch
          %1072 = sbr.rel (%p1070) target = $region60
        $region59: #{rel_pos_mha_forward.3} parent=55 // pred_region
          %s1074 = ssub.s32 128, 128
          %1075 = vsyncadd %s1066, %s1074
          %s1076 = sadd.s32 %s28, %s27
          %s1077 = smul.addr %s1076, 128
          %s1078 = scalar_lea.hbm %s9, %s1077
          %s1080 = sshll.u32 %s1069, 4
          %s1081 = int_to_ptr.vmem [resolvable:$true] %s1080
          %1083 = dma.vmem_to_hbm [thread:$0]  %s1081, 128, %s1078, %s1066
        $region60: #{rel_pos_mha_forward.3} parent=55 // pred_fallthru
          _
      $region56: #{rel_pos_mha_forward.3} parent=5 // pred_fallthru
        _
      %p1084 = scmp.le.s32.totalorder 2, %s18
      // Predicated region
      $region61: #{rel_pos_mha_forward.3} parent=5 // pred_check
        %p1085 = pneg %p1084
      $region62: #{rel_pos_mha_forward.3} parent=5 // pred_check_branch
        %1087 = sbr.rel (%p1085) target = $region64
      $region63: #{rel_pos_mha_forward.3} parent=5 // pred_region
        %s1088 = ssub.s32 %s18, 2
        // Predicated region
        $region65: #{rel_pos_mha_forward.3} parent=63 // pred_check
          %p1089 = pneg %p272
        $region66: #{rel_pos_mha_forward.3} parent=63 // pred_check_branch
          %1091 = sbr.rel (%p1089) target = $region68
        $region67: #{rel_pos_mha_forward.3} parent=63 // pred_region
          %s1092 = sand.u32 %s257, 1
          %s1093 = scalar_lea.sflag [#allocation4], %s1092
          %s1094 = sand.u32 %s257, 1
          %s1095 = smul.addr %s1094, 8
          %s1096 = scalar_lea.vmem [#allocation3], %s1095
          %1097 = dma.done %s1093, 128
        $region68: #{rel_pos_mha_forward.3} parent=63 // pred_fallthru
          _
      $region64: #{rel_pos_mha_forward.3} parent=5 // pred_fallthru
        _
    $region6: #{rel_pos_mha_forward.3} parent=1 // loop_footer
      %s22 = sadd.s32 1, %s18
    $region7: #{rel_pos_mha_forward.3} parent=1 // loop_footer_branch
      %17 = sbr.rel target = $region3
    $region8: #{rel_pos_mha_forward.3} parent=1 // loop_exit
      _
    %1098 = vsyncpa [#allocation4], 1
    %s1099 = scalar_lea.sflag [#allocation4], 1
    %1100 = vsyncpa %s1099, 1

</llo_original>
